<compile_context>
chip_gen: v7x
topology: tpu7x:2x2x1
jax: 0.10.0
libtpu: 0.0.40
codegen_flags: <defaults>
</compile_context>

<pallas_src>
import functools

import jax
import jax.numpy as jnp
from jax import lax
from jax.experimental import pallas as pl
from jax.experimental.pallas import tpu as pltpu


def _round_up(x, m):
    return ((x + m - 1) // m) * m


def _vmem_info():
    """(physical VMEM bytes, tiling budget bytes) for the current chip."""
    phys = 64 * 1024 * 1024          # conservative fallback (v7x per-TC)
    try:
        phys = int(pltpu.get_tpu_info().vmem_capacity_bytes)
    except Exception:
        pass
    return phys, int(phys * 0.7)     # leave headroom for compiler scratch


# ----------------------------------------------------------------------------
# Tile planning (per-generation VMEM budget)
# ----------------------------------------------------------------------------
def plan_tiles(student_n, exer_n, K, *, tm=None, tk=None, x_resident=None,
               stream_dtype=jnp.bfloat16, max_tm=512, max_tk=2048):
    assert K % 128 == 0, "knowledge_dim must be lane-dense (multiple of 128)"
    N = exer_n + student_n
    sb = jnp.dtype(stream_dtype).itemsize
    phys, budget = _vmem_info()

    # --- row tile (parallel axis) -------------------------------------------
    if tm is None:
        tm = min(max_tm, _round_up(student_n, 16))
        if _round_up(student_n, 16) > 16:
            # >= 2 row tiles so v7x's two TensorCores both get work
            # (near-zero cost on single-TC v5e/v6e).
            tm = min(tm, _round_up(pl.cdiv(student_n, 2), 16))
    tm = _round_up(tm, 16)
    n_row_tiles = pl.cdiv(student_n, tm)
    tm = _round_up(pl.cdiv(student_n, n_row_tiles), 16)   # rebalance padding
    s_pad = n_row_tiles * tm

    # --- contraction tile (last grid axis, "arbitrary") ----------------------
    n128 = _round_up(N, 128)
    if x_resident is None:
        # Hold X fully in VMEM if its (double-buffered) footprint is small.
        x_resident = 2 * n128 * K * sb <= budget // 4

    fixed = (2 * n128 * K * sb if x_resident else 0)   # resident X
    fixed += 2 * tm * K * 4                            # stu0 rows (2 bufs)
    fixed += 2 * 2 * tm * K * 4                        # two f32 outputs (2 bufs)
    fixed += tm * 5 * K * 4                            # f32 accumulator scratch
    fixed += 2 * 5 * K * K * 2                         # folded bf16 weights

    if tk is None:
        per_tk = 2 * 5 * tm * sb + (0 if x_resident else 2 * K * sb)
        tk = max(128, (budget - fixed) // per_tk // 128 * 128)
        tk = min(tk, max_tk, n128)
        # Rebalance so contraction padding waste stays < 128 per tile.
        n_k_tiles = pl.cdiv(n128, tk)
        tk = _round_up(pl.cdiv(n128, n_k_tiles), 128)
    tk = _round_up(tk, 128)
    n_pad = _round_up(N, tk)

    return dict(tm=tm, tk=tk, s_pad=s_pad, n_pad=n_pad,
                x_resident=bool(x_resident),
                vmem_limit_bytes=int(phys * 0.9),
                stream_dtype=stream_dtype)


# ----------------------------------------------------------------------------
# One-time operand packing (do NOT call per forward step)
# ----------------------------------------------------------------------------
# Slot order matches the lane-concatenated accumulator:
#   0 = uec, 1 = euc, 2 = eui   (terms shared by both fused outputs)
#   3 = uei                      (only in all_stu_emb)
#   4 = ueip                     (only in all_stu_emb_per)
_A_SLOT_ORDER = ("a_uec", "a_euc", "a_eui", "a_uei", "a_ueip")


def pack_adjacency(params, exer_n, plan):
    """Slice student rows, stack, pad and cast the five adjacencies once."""
    s_pad, n_pad = plan["s_pad"], plan["n_pad"]
    a = jnp.stack([params[n][exer_n:, :] for n in _A_SLOT_ORDER], axis=0)
    out = jnp.zeros((5, s_pad, n_pad), plan["stream_dtype"])
    return out.at[:, :a.shape[1], :a.shape[2]].set(
        a.astype(plan["stream_dtype"]))


def fold_weights(params, K, epilogue_dtype=jnp.bfloat16):
    """Fold each graph weight with its fusion-layer slice: Wc_i = W_i @ Wf_i."""
    wf = params["w_fusion"].astype(jnp.float32)            # (4K, K)
    wc_uec = params["w_uec"].astype(jnp.float32) @ wf[0 * K:1 * K]
    wc_uei = params["w_uei"].astype(jnp.float32) @ wf[1 * K:2 * K]
    wc_ueip = params["w_ueip"].astype(jnp.float32) @ wf[1 * K:2 * K]
    wc_euc = params["w_euc"].astype(jnp.float32) @ wf[2 * K:3 * K]
    wc_eui = params["w_eui"].astype(jnp.float32) @ wf[3 * K:4 * K]
    # Shared terms row-concatenated to match acc[:, :3K] = [h_uec|h_euc|h_eui].
    w_shared = jnp.concatenate([wc_uec, wc_euc, wc_eui], axis=0)
    bias = params["b_fusion"].reshape(1, K).astype(jnp.float32)
    return (w_shared.astype(epilogue_dtype),
            wc_uei.astype(epilogue_dtype),
            wc_ueip.astype(epilogue_dtype),
            bias)


# ----------------------------------------------------------------------------
# Kernel
# ----------------------------------------------------------------------------
def _eva_kernel(a_ref,      # (5, tm, tk)   bf16  five adjacency row-tiles
                x_ref,      # (n_pad, K) or (tk, K)  bf16 embeddings
                stu0_ref,   # (tm, K)       f32   original all_stu_emb rows
                wsh_ref,    # (3K, K)       bf16  folded shared weights
                wuei_ref,   # (K, K)        bf16  folded uei weight
                wueip_ref,  # (K, K)        bf16  folded ueip weight
                b_ref,      # (1, K)        f32   fusion bias
                stu_ref,    # (tm, K)       f32   output: all_stu_emb'
                per_ref,    # (tm, K)       f32   output: all_stu_emb_per'
                acc_ref,    # (tm, 5K)      f32   lane-concatenated accumulator
                *, kdim, tk, x_resident):
    k = pl.program_id(1)
    nk = pl.num_programs(1)

    @pl.when(k == 0)
    def _():
        acc_ref[...] = jnp.zeros_like(acc_ref)

    if x_resident:
        start = pl.multiple_of(k * tk, 128)
        xt = x_ref[pl.ds(start, tk), :]
    else:
        xt = x_ref[...]

    # h_g += A_g_tile @ X_tile for the five graphs, reusing the X tile.
    for g in range(5):                      # static unroll
        sl = slice(g * kdim, (g + 1) * kdim)
        acc_ref[:, sl] = acc_ref[:, sl] + jnp.dot(
            a_ref[g], xt, preferred_element_type=jnp.float32)

    @pl.when(k == nk - 1)
    def _():
        acc = acc_ref[...]
        # Deliberate bf16 epilogue (tiny K=128..384 contractions); accumulate
        # in f32 on the MXU.  Validated against the 2e-2 reference tolerance.
        shared = jnp.dot(acc[:, :3 * kdim].astype(jnp.bfloat16), wsh_ref[...],
                         preferred_element_type=jnp.float32) + b_ref[...]
        stu0 = stu0_ref[...]
        stu_ref[...] = (stu0 + shared + jnp.dot(
            acc[:, 3 * kdim:4 * kdim].astype(jnp.bfloat16), wuei_ref[...],
            preferred_element_type=jnp.float32)).astype(stu_ref.dtype)
        per_ref[...] = (stu0 + shared + jnp.dot(
            acc[:, 4 * kdim:5 * kdim].astype(jnp.bfloat16), wueip_ref[...],
            preferred_element_type=jnp.float32)).astype(per_ref.dtype)


# ----------------------------------------------------------------------------
# Forward wrapper (takes pre-packed adjacency / folded weights)
# ----------------------------------------------------------------------------
def expression_double_eva(exer_emb, all_stu_emb,
                          a_packed, w_shared, w_uei, w_ueip, bias, plan):
    """JAX/Pallas equivalent of ExpressionDooubleEva.forward."""
    exer_n, K = exer_emb.shape
    student_n = all_stu_emb.shape[0]
    N = exer_n + student_n

    tm, tk = plan["tm"], plan["tk"]
    s_pad, n_pad = plan["s_pad"], plan["n_pad"]
    x_resident = plan["x_resident"]
    assert a_packed.shape == (5, s_pad, n_pad)

    # Per-call pads are O(N*K) / O(S*K) -- negligible next to the A stream.
    x = jnp.concatenate([exer_emb, all_stu_emb], axis=0)
    x_p = jnp.pad(x.astype(plan["stream_dtype"]), ((0, n_pad - N), (0, 0)))
    stu0_p = jnp.pad(all_stu_emb.astype(jnp.float32),
                     ((0, s_pad - student_n), (0, 0)))

    grid = (s_pad // tm, n_pad // tk)
    x_spec = (pl.BlockSpec((n_pad, K), lambda i, k: (0, 0)) if x_resident
              else pl.BlockSpec((tk, K), lambda i, k: (k, 0)))

    kernel = functools.partial(_eva_kernel, kdim=K, tk=tk,
                               x_resident=x_resident)

    stu, per = pl.pallas_call(
        kernel,
        out_shape=(jax.ShapeDtypeStruct((s_pad, K), jnp.float32),
                   jax.ShapeDtypeStruct((s_pad, K), jnp.float32)),
        grid_spec=pltpu.PrefetchScalarGridSpec(
            num_scalar_prefetch=0,
            grid=grid,
            in_specs=[
                pl.BlockSpec((5, tm, tk), lambda i, k: (0, i, k)),  # adjacency
                x_spec,                                             # embeddings
                pl.BlockSpec((tm, K), lambda i, k: (i, 0)),         # stu0 rows
                pl.BlockSpec((3 * K, K), lambda i, k: (0, 0)),      # shared Wc
                pl.BlockSpec((K, K), lambda i, k: (0, 0)),          # Wc uei
                pl.BlockSpec((K, K), lambda i, k: (0, 0)),          # Wc ueip
                pl.BlockSpec((1, K), lambda i, k: (0, 0)),          # bias
            ],
            out_specs=(
                pl.BlockSpec((tm, K), lambda i, k: (i, 0)),
                pl.BlockSpec((tm, K), lambda i, k: (i, 0)),
            ),
            scratch_shapes=[pltpu.VMEM((tm, 5 * K), jnp.float32)],
        ),
        compiler_params=pltpu.CompilerParams(
            dimension_semantics=("parallel", "arbitrary"),
            vmem_limit_bytes=plan["vmem_limit_bytes"]),
    )(a_packed, x_p, stu0_p, w_shared, w_uei, w_ueip, bias)

    return stu[:student_n], per[:student_n]


# ----------------------------------------------------------------------------
# Pure-JAX reference (same GCN modelling of the graph sub-modules)
# ----------------------------------------------------------------------------
def expression_double_eva_ref(exer_emb, all_stu_emb, params,
                              stream_dtype=jnp.bfloat16):
    exer_n, K = exer_emb.shape
    hp = lax.Precision.HIGHEST
    x = jnp.concatenate([exer_emb, all_stu_emb], axis=0)
    x = x.astype(stream_dtype).astype(jnp.float32)

    def graph(a, w):
        a = a.astype(stream_dtype).astype(jnp.float32)
        return jnp.dot(jnp.dot(a, x, precision=hp), w, precision=hp)

    g_uec = graph(params["a_uec"], params["w_uec"])
    g_uei = graph(params["a_uei"], params["w_uei"])
    g_ueip = graph(params["a_ueip"], params["w_ueip"])
    g_euc = graph(params["a_euc"], params["w_euc"])
    g_eui = graph(params["a_eui"], params["w_eui"])

    wf, bf = params["w_fusion"], params["b_fusion"]
    all_graphs = jnp.concatenate([g_uec, g_uei, g_euc, g_eui], axis=-1)
    all_graphs_per = jnp.concatenate([g_uec, g_ueip, g_euc, g_eui], axis=-1)
    fusion = jnp.dot(all_graphs, wf, precision=hp) + bf
    fusion_per = jnp.dot(all_graphs_per, wf, precision=hp) + bf

    stu = all_stu_emb + fusion[exer_n:]
    per = all_stu_emb + fusion_per[exer_n:]
    return stu, per


# ----------------------------------------------------------------------------
# Deterministic synthetic parameters (no checkpoint loading)
# ----------------------------------------------------------------------------
def _init_params(key, exer_n, student_n, K):
    N = exer_n + student_n
    ks = jax.random.split(key, 12)

    def adj(k):
        a = jax.random.uniform(k, (N, N), jnp.float32)
        return a / a.sum(axis=-1, keepdims=True)          # row-normalized

    def lin_w(k, fan_in, shape):
        bound = 1.0 / jnp.sqrt(jnp.float32(fan_in))
        return jax.random.uniform(k, shape, jnp.float32, -bound, bound)

    return {
        "a_uec": adj(ks[0]),
        "a_uei": adj(ks[1]),
        "a_ueip": adj(ks[2]),
        "a_euc": adj(ks[3]),
        "a_eui": adj(ks[4]),
        "w_uec": lin_w(ks[5], K, (K, K)),
        "w_uei": lin_w(ks[6], K, (K, K)),
        "w_ueip": lin_w(ks[7], K, (K, K)),
        "w_euc": lin_w(ks[8], K, (K, K)),
        "w_eui": lin_w(ks[9], K, (K, K)),
        # nn.Linear(4K, K): weight stored already transposed to (4K, K)
        "w_fusion": lin_w(ks[10], 4 * K, (4 * K, K)),
        "b_fusion": lin_w(ks[11], 4 * K, (K,)),
    }


if __name__ == "__main__":
    key = jax.random.PRNGKey(0)
    # Small synthetic sizes; K = 128 keeps outputs / lane slices lane-dense.
    exer_n, student_n, K = 160, 96, 128

    k_p, k_e, k_s = jax.random.split(key, 3)
    params = _init_params(k_p, exer_n, student_n, K)
    exer_emb = jax.random.normal(k_e, (exer_n, K), jnp.float32)
    all_stu_emb = jax.random.normal(k_s, (student_n, K), jnp.float32)

    stu_r, per_r = expression_double_eva_ref(exer_emb, all_stu_emb, params)

    # One-time packing (hoisted out of the forward path).
    w_sh, w_uei, w_ueip, bias = fold_weights(params, K)

    # Config 1: planner defaults (VMEM-budgeted tiles, resident X, >=2 row tiles).
    plan = plan_tiles(student_n, exer_n, K)
    a_packed = pack_adjacency(params, exer_n, plan)
    stu, per = expression_double_eva(exer_emb, all_stu_emb,
                                     a_packed, w_sh, w_uei, w_ueip, bias, plan)
    jax.block_until_ready((stu, per))
    assert stu.shape == (student_n, K) and per.shape == (student_n, K)
    assert jnp.allclose(stu, stu_r, atol=2e-2, rtol=2e-2)
    assert jnp.allclose(per, per_r, atol=2e-2, rtol=2e-2)

    # Config 2: forced small tiles + streamed X — exercises the multi-step
    # contraction/accumulator path with a (3, 2) grid.
    plan2 = plan_tiles(student_n, exer_n, K, tm=32, tk=128, x_resident=False)
    a_packed2 = pack_adjacency(params, exer_n, plan2)
    stu2, per2 = expression_double_eva(exer_emb, all_stu_emb,
                                       a_packed2, w_sh, w_uei, w_ueip, bias,
                                       plan2)
    jax.block_until_ready((stu2, per2))
    assert jnp.allclose(stu2, stu_r, atol=2e-2, rtol=2e-2)
    assert jnp.allclose(per2, per_r, atol=2e-2, rtol=2e-2)

    print("KERNEL_OK")
</pallas_src>

<mosaic_0001>
module attributes {stable_mosaic.version = 11 : i64} {
  func.func @_eva_kernel(%arg0: i32, %arg1: i32, %arg2: memref<5x48x256xbf16, #tpu.memory_space<vmem>>, %arg3: memref<256x128xbf16, #tpu.memory_space<vmem>>, %arg4: memref<48x128xf32, #tpu.memory_space<vmem>>, %arg5: memref<384x128xbf16, #tpu.memory_space<vmem>>, %arg6: memref<128x128xbf16, #tpu.memory_space<vmem>>, %arg7: memref<128x128xbf16, #tpu.memory_space<vmem>>, %arg8: memref<1x128xf32, #tpu.memory_space<vmem>>, %arg9: memref<48x128xf32, #tpu.memory_space<vmem>>, %arg10: memref<48x128xf32, #tpu.memory_space<vmem>>, %arg11: memref<48x640xf32, #tpu.memory_space<vmem>>) attributes {dimension_semantics = [#tpu.dimension_semantics<parallel>, #tpu.dimension_semantics<arbitrary>], iteration_bounds = array<i64: 2, 1>, scalar_prefetch = 0 : i64, scratch_operands = 1 : i64, tpu.core_type = #tpu.core_type<tc>, window_params = [{transform_indices = @transform_0, window_bounds = array<i64: 5, 48, 256>}, {pipeline_mode = #tpu.pipeline_mode<synchronous>, transform_indices = @transform_1, window_bounds = array<i64: 256, 128>}, {transform_indices = @transform_2, window_bounds = array<i64: 48, 128>}, {pipeline_mode = #tpu.pipeline_mode<synchronous>, transform_indices = @transform_3, window_bounds = array<i64: 384, 128>}, {pipeline_mode = #tpu.pipeline_mode<synchronous>, transform_indices = @transform_4, window_bounds = array<i64: 128, 128>}, {pipeline_mode = #tpu.pipeline_mode<synchronous>, transform_indices = @transform_5, window_bounds = array<i64: 128, 128>}, {pipeline_mode = #tpu.pipeline_mode<synchronous>, transform_indices = @transform_6, window_bounds = array<i64: 1, 128>}, {transform_indices = @transform_7, window_bounds = array<i64: 48, 128>}, {transform_indices = @transform_8, window_bounds = array<i64: 48, 128>}]} {
    %c0_i32 = arith.constant 0 : i32
    %0 = arith.cmpi eq, %arg1, %c0_i32 : i32
    %1 = arith.extui %0 : i1 to i32
    %c0_i32_0 = arith.constant 0 : i32
    %2 = arith.cmpi ne, %1, %c0_i32_0 : i32
    scf.if %2 {
      %cst_34 = arith.constant 0.000000e+00 : f32
      %40 = vector.broadcast %cst_34 : f32 to vector<48x640xf32>
      %c0_35 = arith.constant 0 : index
      %c0_36 = arith.constant 0 : index
      %41 = vector.load %arg11[%c0_35, %c0_36] : memref<48x640xf32, #tpu.memory_space<vmem>>, vector<48x640xf32>
      tpu.vector_store %arg11[%c0_35, %c0_36], %40 {strides = array<i32>} : memref<48x640xf32, #tpu.memory_space<vmem>>, vector<48x640xf32>,
    } else {
    }
    %c256_i32 = arith.constant 256 : i32
    %3 = arith.muli %arg1, %c256_i32 : i32
    %4 = tpu.assume_multiple %3, 128 : i32
    %5 = arith.index_cast %4 : i32 to index
    %c0 = arith.constant 0 : index
    %6 = vector.load %arg3[%5, %c0] : memref<256x128xbf16, #tpu.memory_space<vmem>>, vector<256x128xbf16>
    %c0_1 = arith.constant 0 : index
    %c0_2 = arith.constant 0 : index
    %7 = vector.load %arg11[%c0_1, %c0_2] : memref<48x640xf32, #tpu.memory_space<vmem>>, vector<48x128xf32>
    %c0_3 = arith.constant 0 : index
    %c0_4 = arith.constant 0 : index
    %c0_5 = arith.constant 0 : index
    %8 = vector.load %arg2[%c0_3, %c0_4, %c0_5] : memref<5x48x256xbf16, #tpu.memory_space<vmem>>, vector<1x48x256xbf16>
    %9 = vector.shape_cast %8 : vector<1x48x256xbf16> to vector<48x256xbf16>
    %cst = arith.constant dense<0.000000e+00> : vector<48x128xf32>
    %10 = tpu.matmul %9, %6, %cst {dimension_numbers = #tpu.dot_dimension_numbers<[1], [0], [0], [1], [0, 0, 1, 1], [], []>} : vector<48x256xbf16>, vector<256x128xbf16>, vector<48x128xf32> -> vector<48x128xf32>
    %11 = arith.addf %7, %10 : vector<48x128xf32>
    %c0_6 = arith.constant 0 : index
    %c0_7 = arith.constant 0 : index
    %12 = vector.load %arg11[%c0_6, %c0_7] : memref<48x640xf32, #tpu.memory_space<vmem>>, vector<48x128xf32>
    tpu.vector_store %arg11[%c0_6, %c0_7], %11 {strides = array<i32>} : memref<48x640xf32, #tpu.memory_space<vmem>>, vector<48x128xf32>,
    %c0_8 = arith.constant 0 : index
    %c128 = arith.constant 128 : index
    %13 = vector.load %arg11[%c0_8, %c128] : memref<48x640xf32, #tpu.memory_space<vmem>>, vector<48x128xf32>
    %c1 = arith.constant 1 : index
    %c0_9 = arith.constant 0 : index
    %c0_10 = arith.constant 0 : index
    %14 = vector.load %arg2[%c1, %c0_9, %c0_10] : memref<5x48x256xbf16, #tpu.memory_space<vmem>>, vector<1x48x256xbf16>
    %15 = vector.shape_cast %14 : vector<1x48x256xbf16> to vector<48x256xbf16>
    %cst_11 = arith.constant dense<0.000000e+00> : vector<48x128xf32>
    %16 = tpu.matmul %15, %6, %cst_11 {dimension_numbers = #tpu.dot_dimension_numbers<[1], [0], [0], [1], [0, 0, 1, 1], [], []>} : vector<48x256xbf16>, vector<256x128xbf16>, vector<48x128xf32> -> vector<48x128xf32>
    %17 = arith.addf %13, %16 : vector<48x128xf32>
    %c0_12 = arith.constant 0 : index
    %c128_13 = arith.constant 128 : index
    %18 = vector.load %arg11[%c0_12, %c128_13] : memref<48x640xf32, #tpu.memory_space<vmem>>, vector<48x128xf32>
    tpu.vector_store %arg11[%c0_12, %c128_13], %17 {strides = array<i32>} : memref<48x640xf32, #tpu.memory_space<vmem>>, vector<48x128xf32>,
    %c0_14 = arith.constant 0 : index
    %c256 = arith.constant 256 : index
    %19 = vector.load %arg11[%c0_14, %c256] : memref<48x640xf32, #tpu.memory_space<vmem>>, vector<48x128xf32>
    %c2 = arith.constant 2 : index
    %c0_15 = arith.constant 0 : index
    %c0_16 = arith.constant 0 : index
    %20 = vector.load %arg2[%c2, %c0_15, %c0_16] : memref<5x48x256xbf16, #tpu.memory_space<vmem>>, vector<1x48x256xbf16>
    %21 = vector.shape_cast %20 : vector<1x48x256xbf16> to vector<48x256xbf16>
    %cst_17 = arith.constant dense<0.000000e+00> : vector<48x128xf32>
    %22 = tpu.matmul %21, %6, %cst_17 {dimension_numbers = #tpu.dot_dimension_numbers<[1], [0], [0], [1], [0, 0, 1, 1], [], []>} : vector<48x256xbf16>, vector<256x128xbf16>, vector<48x128xf32> -> vector<48x128xf32>
    %23 = arith.addf %19, %22 : vector<48x128xf32>
    %c0_18 = arith.constant 0 : index
    %c256_19 = arith.constant 256 : index
    %24 = vector.load %arg11[%c0_18, %c256_19] : memref<48x640xf32, #tpu.memory_space<vmem>>, vector<48x128xf32>
    tpu.vector_store %arg11[%c0_18, %c256_19], %23 {strides = array<i32>} : memref<48x640xf32, #tpu.memory_space<vmem>>, vector<48x128xf32>,
    %c0_20 = arith.constant 0 : index
    %c384 = arith.constant 384 : index
    %25 = vector.load %arg11[%c0_20, %c384] : memref<48x640xf32, #tpu.memory_space<vmem>>, vector<48x128xf32>
    %c3 = arith.constant 3 : index
    %c0_21 = arith.constant 0 : index
    %c0_22 = arith.constant 0 : index
    %26 = vector.load %arg2[%c3, %c0_21, %c0_22] : memref<5x48x256xbf16, #tpu.memory_space<vmem>>, vector<1x48x256xbf16>
    %27 = vector.shape_cast %26 : vector<1x48x256xbf16> to vector<48x256xbf16>
    %cst_23 = arith.constant dense<0.000000e+00> : vector<48x128xf32>
    %28 = tpu.matmul %27, %6, %cst_23 {dimension_numbers = #tpu.dot_dimension_numbers<[1], [0], [0], [1], [0, 0, 1, 1], [], []>} : vector<48x256xbf16>, vector<256x128xbf16>, vector<48x128xf32> -> vector<48x128xf32>
    %29 = arith.addf %25, %28 : vector<48x128xf32>
    %c0_24 = arith.constant 0 : index
    %c384_25 = arith.constant 384 : index
    %30 = vector.load %arg11[%c0_24, %c384_25] : memref<48x640xf32, #tpu.memory_space<vmem>>, vector<48x128xf32>
    tpu.vector_store %arg11[%c0_24, %c384_25], %29 {strides = array<i32>} : memref<48x640xf32, #tpu.memory_space<vmem>>, vector<48x128xf32>,
    %c0_26 = arith.constant 0 : index
    %c512 = arith.constant 512 : index
    %31 = vector.load %arg11[%c0_26, %c512] : memref<48x640xf32, #tpu.memory_space<vmem>>, vector<48x128xf32>
    %c4 = arith.constant 4 : index
    %c0_27 = arith.constant 0 : index
    %c0_28 = arith.constant 0 : index
    %32 = vector.load %arg2[%c4, %c0_27, %c0_28] : memref<5x48x256xbf16, #tpu.memory_space<vmem>>, vector<1x48x256xbf16>
    %33 = vector.shape_cast %32 : vector<1x48x256xbf16> to vector<48x256xbf16>
    %cst_29 = arith.constant dense<0.000000e+00> : vector<48x128xf32>
    %34 = tpu.matmul %33, %6, %cst_29 {dimension_numbers = #tpu.dot_dimension_numbers<[1], [0], [0], [1], [0, 0, 1, 1], [], []>} : vector<48x256xbf16>, vector<256x128xbf16>, vector<48x128xf32> -> vector<48x128xf32>
    %35 = arith.addf %31, %34 : vector<48x128xf32>
    %c0_30 = arith.constant 0 : index
    %c512_31 = arith.constant 512 : index
    %36 = vector.load %arg11[%c0_30, %c512_31] : memref<48x640xf32, #tpu.memory_space<vmem>>, vector<48x128xf32>
    tpu.vector_store %arg11[%c0_30, %c512_31], %35 {strides = array<i32>} : memref<48x640xf32, #tpu.memory_space<vmem>>, vector<48x128xf32>,
    %c0_i32_32 = arith.constant 0 : i32
    %37 = arith.cmpi eq, %arg1, %c0_i32_32 : i32
    %38 = arith.extui %37 : i1 to i32
    %c0_i32_33 = arith.constant 0 : i32
    %39 = arith.cmpi ne, %38, %c0_i32_33 : i32
    scf.if %39 {
      %c0_34 = arith.constant 0 : index
      %c0_35 = arith.constant 0 : index
      %40 = vector.load %arg11[%c0_34, %c0_35] : memref<48x640xf32, #tpu.memory_space<vmem>>, vector<48x640xf32>
      %41 = vector.extract_strided_slice %40 {offsets = [0, 0], sizes = [48, 384], strides = [1, 1]} : vector<48x640xf32> to vector<48x384xf32>
      %42 = arith.truncf %41 : vector<48x384xf32> to vector<48x384xbf16>
      %c0_36 = arith.constant 0 : index
      %c0_37 = arith.constant 0 : index
      %43 = vector.load %arg5[%c0_36, %c0_37] : memref<384x128xbf16, #tpu.memory_space<vmem>>, vector<384x128xbf16>
      %cst_38 = arith.constant dense<0.000000e+00> : vector<48x128xf32>
      %44 = tpu.matmul %42, %43, %cst_38 {dimension_numbers = #tpu.dot_dimension_numbers<[1], [0], [0], [1], [0, 0, 1, 1], [], []>} : vector<48x384xbf16>, vector<384x128xbf16>, vector<48x128xf32> -> vector<48x128xf32>
      %c0_39 = arith.constant 0 : index
      %c0_40 = arith.constant 0 : index
      %45 = vector.load %arg8[%c0_39, %c0_40] : memref<1x128xf32, #tpu.memory_space<vmem>>, vector<1x128xf32>
      %46 = vector.broadcast %45 : vector<1x128xf32> to vector<48x128xf32>
      %47 = arith.addf %44, %46 : vector<48x128xf32>
      %c0_41 = arith.constant 0 : index
      %c0_42 = arith.constant 0 : index
      %48 = vector.load %arg4[%c0_41, %c0_42] : memref<48x128xf32, #tpu.memory_space<vmem>>, vector<48x128xf32>
      %49 = arith.addf %48, %47 : vector<48x128xf32>
      %50 = vector.extract_strided_slice %40 {offsets = [0, 384], sizes = [48, 128], strides = [1, 1]} : vector<48x640xf32> to vector<48x128xf32>
      %51 = arith.truncf %50 : vector<48x128xf32> to vector<48x128xbf16>
      %c0_43 = arith.constant 0 : index
      %c0_44 = arith.constant 0 : index
      %52 = vector.load %arg6[%c0_43, %c0_44] : memref<128x128xbf16, #tpu.memory_space<vmem>>, vector<128x128xbf16>
      %cst_45 = arith.constant dense<0.000000e+00> : vector<48x128xf32>
      %53 = tpu.matmul %51, %52, %cst_45 {dimension_numbers = #tpu.dot_dimension_numbers<[1], [0], [0], [1], [0, 0, 1, 1], [], []>} : vector<48x128xbf16>, vector<128x128xbf16>, vector<48x128xf32> -> vector<48x128xf32>
      %54 = arith.addf %49, %53 : vector<48x128xf32>
      %c0_46 = arith.constant 0 : index
      %c0_47 = arith.constant 0 : index
      %55 = vector.load %arg9[%c0_46, %c0_47] : memref<48x128xf32, #tpu.memory_space<vmem>>, vector<48x128xf32>
      tpu.vector_store %arg9[%c0_46, %c0_47], %54 {strides = array<i32>} : memref<48x128xf32, #tpu.memory_space<vmem>>, vector<48x128xf32>,
      %56 = arith.addf %48, %47 : vector<48x128xf32>
      %57 = vector.extract_strided_slice %40 {offsets = [0, 512], sizes = [48, 128], strides = [1, 1]} : vector<48x640xf32> to vector<48x128xf32>
      %58 = arith.truncf %57 : vector<48x128xf32> to vector<48x128xbf16>
      %c0_48 = arith.constant 0 : index
      %c0_49 = arith.constant 0 : index
      %59 = vector.load %arg7[%c0_48, %c0_49] : memref<128x128xbf16, #tpu.memory_space<vmem>>, vector<128x128xbf16>
      %cst_50 = arith.constant dense<0.000000e+00> : vector<48x128xf32>
      %60 = tpu.matmul %58, %59, %cst_50 {dimension_numbers = #tpu.dot_dimension_numbers<[1], [0], [0], [1], [0, 0, 1, 1], [], []>} : vector<48x128xbf16>, vector<128x128xbf16>, vector<48x128xf32> -> vector<48x128xf32>
      %61 = arith.addf %56, %60 : vector<48x128xf32>
      %c0_51 = arith.constant 0 : index
      %c0_52 = arith.constant 0 : index
      %62 = vector.load %arg10[%c0_51, %c0_52] : memref<48x128xf32, #tpu.memory_space<vmem>>, vector<48x128xf32>
      tpu.vector_store %arg10[%c0_51, %c0_52], %61 {strides = array<i32>} : memref<48x128xf32, #tpu.memory_space<vmem>>, vector<48x128xf32>,
    } else {
    }
    return
  }
  func.func @transform_0(%arg0: i32, %arg1: i32) -> (i32, i32, i32) {
    %c0_i32 = arith.constant 0 : i32
    %c0_i32_0 = arith.constant 0 : i32
    return %c0_i32, %arg0, %arg1 : i32, i32, i32
  }
  func.func @transform_1(%arg0: i32, %arg1: i32) -> (i32, i32) {
    %c0_i32 = arith.constant 0 : i32
    %c0_i32_0 = arith.constant 0 : i32
    %c0_i32_1 = arith.constant 0 : i32
    return %c0_i32, %c0_i32_0 : i32, i32
  }
  func.func @transform_2(%arg0: i32, %arg1: i32) -> (i32, i32) {
    %c0_i32 = arith.constant 0 : i32
    %c0_i32_0 = arith.constant 0 : i32
    return %arg0, %c0_i32 : i32, i32
  }
  func.func @transform_3(%arg0: i32, %arg1: i32) -> (i32, i32) {
    %c0_i32 = arith.constant 0 : i32
    %c0_i32_0 = arith.constant 0 : i32
    %c0_i32_1 = arith.constant 0 : i32
    return %c0_i32, %c0_i32_0 : i32, i32
  }
  func.func @transform_4(%arg0: i32, %arg1: i32) -> (i32, i32) {
    %c0_i32 = arith.constant 0 : i32
    %c0_i32_0 = arith.constant 0 : i32
    %c0_i32_1 = arith.constant 0 : i32
    return %c0_i32, %c0_i32_0 : i32, i32
  }
  func.func @transform_5(%arg0: i32, %arg1: i32) -> (i32, i32) {
    %c0_i32 = arith.constant 0 : i32
    %c0_i32_0 = arith.constant 0 : i32
    %c0_i32_1 = arith.constant 0 : i32
    return %c0_i32, %c0_i32_0 : i32, i32
  }
  func.func @transform_6(%arg0: i32, %arg1: i32) -> (i32, i32) {
    %c0_i32 = arith.constant 0 : i32
    %c0_i32_0 = arith.constant 0 : i32
    %c0_i32_1 = arith.constant 0 : i32
    return %c0_i32, %c0_i32_0 : i32, i32
  }
  func.func @transform_7(%arg0: i32, %arg1: i32) -> (i32, i32) {
    %c0_i32 = arith.constant 0 : i32
    %c0_i32_0 = arith.constant 0 : i32
    return %arg0, %c0_i32 : i32, i32
  }
  func.func @transform_8(%arg0: i32, %arg1: i32) -> (i32, i32) {
    %c0_i32 = arith.constant 0 : i32
    %c0_i32_0 = arith.constant 0 : i32
    return %arg0, %c0_i32 : i32, i32
  }
}

</mosaic_0001>

<llo_original>
// kernel: tpu_custom_call.1
$region0: #{tpu_custom_call.1}
  #allocation0 [shape = 'u32[]', space=smem, size = 0x4, offset = 0x4, fixed_abs, tag = 'smem constant byte address 0x4 - core index']
  #allocation1 [shape = 'u32[144,128]{1,0:T(1,128)}', space=vmem, size = 0x12000, scoped, tag = 'internal scratch']
  #allocation2 [shape = 'f32[48,640]{1,0:T(8,128)}', space=vmem, size = 0x1e000, scoped, tag = 'scratch operand']
  #allocation16 [shape = 's32[]', space=sflag, size = 0x4, offset = 0, fixed_abs, tag = 'sflag constant byte address 0x0 - dummy sync flag']
  %s0 = inlined_call_operand.hbm [shape: bf16[5,96,256], index: 0, kind: input, shape index: {}]
  %s1 = inlined_call_operand.hbm [shape: bf16[256,128], index: 1, kind: input, shape index: {}]
  %s2 = inlined_call_operand.hbm [shape: f32[96,128], index: 2, kind: input, shape index: {}]
  %s3 = inlined_call_operand.hbm [shape: bf16[384,128], index: 3, kind: input, shape index: {}]
  %s4 = inlined_call_operand.hbm [shape: bf16[128,128], index: 4, kind: input, shape index: {}]
  %s5 = inlined_call_operand.hbm [shape: bf16[128,128], index: 5, kind: input, shape index: {}]
  %s6 = inlined_call_operand.vmem [shape: f32[1,128], index: 6, kind: input, shape index: {}]
  %s7 = inlined_call_operand.hbm [shape: f32[96,128], index: 7, kind: output, shape index: {0}]
  %s8 = inlined_call_operand.hbm [shape: f32[96,128], index: 8, kind: output, shape index: {1}]
  %9 = xla_tuple %s7, %s8
  %s10 = sld [smem:[#allocation0]]
  $region101: #{tpu_custom_call.1} parent=0
    _
  %s12 = ssub.s32 1, %s10
  %s13 = scalar_select 0, %s12, %s10
  $region1: #{tpu_custom_call.1} parent=0
    #allocation3 [shape = 'u8[245760]{0}', space=vmem, size = 0x3c000, scoped, tag = 'input window, operand 0']
    #allocation4 [shape = 's32[2]{0}', space=sflag, size = 0x8, scoped, tag = 'scoped memory for tpu_custom_call.1']
    #allocation5 [shape = 's32[2]{0}', space=sflag, size = 0x8, scoped, tag = 'scoped memory for tpu_custom_call.1']
    #allocation6 [shape = 'u8[65536]{0}', space=vmem, size = 0x10000, scoped, tag = 'input window, operand 1, single buffered']
    #allocation7 [shape = 's32[1]{0}', space=sflag, size = 0x4, scoped, tag = 'scoped memory for tpu_custom_call.1']
    #allocation8 [shape = 'u8[49152]{0}', space=vmem, size = 0xc000, scoped, tag = 'input window, operand 2']
    #allocation9 [shape = 'u8[98304]{0}', space=vmem, size = 0x18000, scoped, tag = 'input window, operand 3, single buffered']
    #allocation10 [shape = 'u8[32768]{0}', space=vmem, size = 0x8000, scoped, tag = 'input window, operand 4, single buffered']
    #allocation11 [shape = 's32[1]{0}', space=sflag, size = 0x4, scoped, tag = 'scoped memory for tpu_custom_call.1']
    #allocation12 [shape = 'u8[32768]{0}', space=vmem, size = 0x8000, scoped, tag = 'input window, operand 5, single buffered']
    #allocation13 [shape = 'u8[49152]{0}', space=vmem, size = 0xc000, scoped, tag = 'output window, operand 0']
    #allocation14 [shape = 'u8[49152]{0}', space=vmem, size = 0xc000, scoped, tag = 'output window, operand 1']
    #allocation15 [shape = 's32[2]{0}', space=sflag, size = 0x8, scoped, tag = 'scoped memory for tpu_custom_call.1']
    %14 = vsyncpa [#allocation4], 0
    %s15 = scalar_lea.sflag [#allocation4], 1
    %16 = vsyncpa %s15, 0
    %17 = vsyncpa [#allocation7], 0
    %18 = vsyncpa [#allocation11], 0
    %19 = vsyncpa [#allocation5], 0
    %s20 = scalar_lea.sflag [#allocation5], 1
    %21 = vsyncpa %s20, 0
    %22 = vsyncpa [#allocation15], 0
    %s23 = scalar_lea.sflag [#allocation15], 1
    %24 = vsyncpa %s23, 0
    loop: start=0, step=1, limit=4
    $region2: #{tpu_custom_call.1} parent=1 // loop_pre_header
      _
    $region3: #{tpu_custom_call.1} parent=1 // loop_header
      %s26 = sphi 0, %s30
      %p27 = scmp.ge.s32.totalorder %s26, 4
      %s33 = sphi 0, %s45
      %s34 = sphi 0, %s41
      %s35 = sphi 0, %s33
      %s36 = sphi 0, %s34
      %s37 = sphi 0, %s35
      %s38 = sphi 0, %s36
      %s50 = sphi 0, %s52
      %s53 = sphi 0, %s50
      %s54 = sphi 0, %s53
      %s70 = sphi 0, %s54
      %s74 = sphi 0, %s74
      %s76 = sphi 0, %s74
      %s77 = sphi 0, %s76
      %s91 = sphi 0, %s77
      %s97 = sphi 0, %s99
      %s100 = sphi 0, %s97
      %s101 = sphi 0, %s100
      %s117 = sphi 0, %s101
      %s121 = sphi 0, %s121
      %s123 = sphi 0, %s121
      %s124 = sphi 0, %s123
      %s138 = sphi 0, %s124
      %s142 = sphi 0, %s142
      %s144 = sphi 0, %s142
      %s145 = sphi 0, %s144
      %s159 = sphi 0, %s145
      %s163 = sphi 0, %s163
      %s165 = sphi 0, %s163
      %s166 = sphi 0, %s165
      %s180 = sphi 0, %s166
      %s184 = sphi 0, %s184
      %s186 = sphi 0, %s184
      %s187 = sphi 0, %s186
      %s201 = sphi 0, %s187
      %s207 = sphi 0, %s209
      %s210 = sphi 0, %s207
      %s211 = sphi 0, %s210
      %s227 = sphi 0, %s211
      %s233 = sphi 0, %s235
      %s236 = sphi 0, %s233
      %s237 = sphi 0, %s236
      %s253 = sphi 0, %s237
    $region4: #{tpu_custom_call.1} parent=1 // loop_header_branch
      %29 = sbr.rel (%p27) target = $region8
    $region5: #{tpu_custom_call.1} parent=1 // loop_body
      %s31 = ssub.s32 %s26, 1
      %s32 = ssub.s32 %s26, 2
      %s39 = sadd.s32 1, %s34
      %p40 = scmp.ge.s32.totalorder %s39, 1
      %s41 = scalar_select %p40, 0, %s39
      %s42 = sadd.s32 1, %s33
      %s43 = scalar_select %p40, %s42, %s33
      %p44 = scmp.ge.s32.totalorder %s43, 2
      %s45 = scalar_select %p44, 0, %s43
      %s46 = ssub.s32 %s33, %s45
      %s47 = ssub.s32 %s34, %s41
      %s48 = sor.u32 %s46, %s47
      %p49 = scmp.eq.s32.totalorder %s48, 0
      %s51 = sadd.s32 %s50, 1
      %s52 = scalar_select %p49, %s50, %s51
      %p55 = pneg %p49
      %p56 = scmp.eq.s32.totalorder %s26, 1
      %p57 = por %p55, %p56
      %p58 = scmp.ne.s32.totalorder %s50, %s53
      %p59 = scmp.eq.s32.totalorder %s26, 0
      %p60 = por %p58, %p59
      %p61 = scmp.ne.s32.totalorder %s50, %s53
      %p62 = scmp.eq.s32.totalorder %s31, 1
      %p63 = por %p61, %p62
      %p64 = scmp.ne.s32.totalorder %s53, %s54
      %p65 = scmp.eq.s32.totalorder %s31, 0
      %p66 = por %p64, %p65
      %p67 = scmp.ne.s32.totalorder %s53, %s54
      %p68 = scmp.eq.s32.totalorder %s32, 1
      %p69 = por %p67, %p68
      %p71 = scmp.ne.s32.totalorder %s54, %s70
      %p72 = scmp.eq.s32.totalorder %s32, 0
      %p73 = por %p71, %p72
      %s75 = sadd.s32 %s74, 1
      %p78 = scmp.eq.s32.totalorder %s26, 1
      %p79 = scmp.ne.s32.totalorder %s74, %s76
      %p80 = scmp.eq.s32.totalorder %s26, 0
      %p81 = por %p79, %p80
      %p82 = scmp.ne.s32.totalorder %s74, %s76
      %p83 = scmp.eq.s32.totalorder %s31, 1
      %p84 = por %p82, %p83
      %p85 = scmp.ne.s32.totalorder %s76, %s77
      %p86 = scmp.eq.s32.totalorder %s31, 0
      %p87 = por %p85, %p86
      %p88 = scmp.ne.s32.totalorder %s76, %s77
      %p89 = scmp.eq.s32.totalorder %s32, 1
      %p90 = por %p88, %p89
      %p92 = scmp.ne.s32.totalorder %s77, %s91
      %p93 = scmp.eq.s32.totalorder %s32, 0
      %p94 = por %p92, %p93
      %s95 = ssub.s32 %s33, %s45
      %p96 = scmp.eq.s32.totalorder %s95, 0
      %s98 = sadd.s32 %s97, 1
      %s99 = scalar_select %p96, %s97, %s98
      %p102 = pneg %p96
      %p103 = scmp.eq.s32.totalorder %s26, 1
      %p104 = por %p102, %p103
      %p105 = scmp.ne.s32.totalorder %s97, %s100
      %p106 = scmp.eq.s32.totalorder %s26, 0
      %p107 = por %p105, %p106
      %p108 = scmp.ne.s32.totalorder %s97, %s100
      %p109 = scmp.eq.s32.totalorder %s31, 1
      %p110 = por %p108, %p109
      %p111 = scmp.ne.s32.totalorder %s100, %s101
      %p112 = scmp.eq.s32.totalorder %s31, 0
      %p113 = por %p111, %p112
      %p114 = scmp.ne.s32.totalorder %s100, %s101
      %p115 = scmp.eq.s32.totalorder %s32, 1
      %p116 = por %p114, %p115
      %p118 = scmp.ne.s32.totalorder %s101, %s117
      %p119 = scmp.eq.s32.totalorder %s32, 0
      %p120 = por %p118, %p119
      %s122 = sadd.s32 %s121, 1
      %p125 = scmp.eq.s32.totalorder %s26, 1
      %p126 = scmp.ne.s32.totalorder %s121, %s123
      %p127 = scmp.eq.s32.totalorder %s26, 0
      %p128 = por %p126, %p127
      %p129 = scmp.ne.s32.totalorder %s121, %s123
      %p130 = scmp.eq.s32.totalorder %s31, 1
      %p131 = por %p129, %p130
      %p132 = scmp.ne.s32.totalorder %s123, %s124
      %p133 = scmp.eq.s32.totalorder %s31, 0
      %p134 = por %p132, %p133
      %p135 = scmp.ne.s32.totalorder %s123, %s124
      %p136 = scmp.eq.s32.totalorder %s32, 1
      %p137 = por %p135, %p136
      %p139 = scmp.ne.s32.totalorder %s124, %s138
      %p140 = scmp.eq.s32.totalorder %s32, 0
      %p141 = por %p139, %p140
      %s143 = sadd.s32 %s142, 1
      %p146 = scmp.eq.s32.totalorder %s26, 1
      %p147 = scmp.ne.s32.totalorder %s142, %s144
      %p148 = scmp.eq.s32.totalorder %s26, 0
      %p149 = por %p147, %p148
      %p150 = scmp.ne.s32.totalorder %s142, %s144
      %p151 = scmp.eq.s32.totalorder %s31, 1
      %p152 = por %p150, %p151
      %p153 = scmp.ne.s32.totalorder %s144, %s145
      %p154 = scmp.eq.s32.totalorder %s31, 0
      %p155 = por %p153, %p154
      %p156 = scmp.ne.s32.totalorder %s144, %s145
      %p157 = scmp.eq.s32.totalorder %s32, 1
      %p158 = por %p156, %p157
      %p160 = scmp.ne.s32.totalorder %s145, %s159
      %p161 = scmp.eq.s32.totalorder %s32, 0
      %p162 = por %p160, %p161
      %s164 = sadd.s32 %s163, 1
      %p167 = scmp.eq.s32.totalorder %s26, 1
      %p168 = scmp.ne.s32.totalorder %s163, %s165
      %p169 = scmp.eq.s32.totalorder %s26, 0
      %p170 = por %p168, %p169
      %p171 = scmp.ne.s32.totalorder %s163, %s165
      %p172 = scmp.eq.s32.totalorder %s31, 1
      %p173 = por %p171, %p172
      %p174 = scmp.ne.s32.totalorder %s165, %s166
      %p175 = scmp.eq.s32.totalorder %s31, 0
      %p176 = por %p174, %p175
      %p177 = scmp.ne.s32.totalorder %s165, %s166
      %p178 = scmp.eq.s32.totalorder %s32, 1
      %p179 = por %p177, %p178
      %p181 = scmp.ne.s32.totalorder %s166, %s180
      %p182 = scmp.eq.s32.totalorder %s32, 0
      %p183 = por %p181, %p182
      %s185 = sadd.s32 %s184, 1
      %p188 = scmp.eq.s32.totalorder %s26, 1
      %p189 = scmp.ne.s32.totalorder %s184, %s186
      %p190 = scmp.eq.s32.totalorder %s26, 0
      %p191 = por %p189, %p190
      %p192 = scmp.ne.s32.totalorder %s184, %s186
      %p193 = scmp.eq.s32.totalorder %s31, 1
      %p194 = por %p192, %p193
      %p195 = scmp.ne.s32.totalorder %s186, %s187
      %p196 = scmp.eq.s32.totalorder %s31, 0
      %p197 = por %p195, %p196
      %p198 = scmp.ne.s32.totalorder %s186, %s187
      %p199 = scmp.eq.s32.totalorder %s32, 1
      %p200 = por %p198, %p199
      %p202 = scmp.ne.s32.totalorder %s187, %s201
      %p203 = scmp.eq.s32.totalorder %s32, 0
      %p204 = por %p202, %p203
      %s205 = ssub.s32 %s33, %s45
      %p206 = scmp.eq.s32.totalorder %s205, 0
      %s208 = sadd.s32 %s207, 1
      %s209 = scalar_select %p206, %s207, %s208
      %p212 = pneg %p206
      %p213 = scmp.eq.s32.totalorder %s26, 1
      %p214 = por %p212, %p213
      %p215 = scmp.ne.s32.totalorder %s207, %s210
      %p216 = scmp.eq.s32.totalorder %s26, 0
      %p217 = por %p215, %p216
      %p218 = scmp.ne.s32.totalorder %s207, %s210
      %p219 = scmp.eq.s32.totalorder %s31, 1
      %p220 = por %p218, %p219
      %p221 = scmp.ne.s32.totalorder %s210, %s211
      %p222 = scmp.eq.s32.totalorder %s31, 0
      %p223 = por %p221, %p222
      %p224 = scmp.ne.s32.totalorder %s210, %s211
      %p225 = scmp.eq.s32.totalorder %s32, 1
      %p226 = por %p224, %p225
      %p228 = scmp.ne.s32.totalorder %s211, %s227
      %p229 = scmp.eq.s32.totalorder %s32, 0
      %p230 = por %p228, %p229
      %s231 = ssub.s32 %s33, %s45
      %p232 = scmp.eq.s32.totalorder %s231, 0
      %s234 = sadd.s32 %s233, 1
      %s235 = scalar_select %p232, %s233, %s234
      %p238 = pneg %p232
      %p239 = scmp.eq.s32.totalorder %s26, 1
      %p240 = por %p238, %p239
      %p241 = scmp.ne.s32.totalorder %s233, %s236
      %p242 = scmp.eq.s32.totalorder %s26, 0
      %p243 = por %p241, %p242
      %p244 = scmp.ne.s32.totalorder %s233, %s236
      %p245 = scmp.eq.s32.totalorder %s31, 1
      %p246 = por %p244, %p245
      %p247 = scmp.ne.s32.totalorder %s236, %s237
      %p248 = scmp.eq.s32.totalorder %s31, 0
      %p249 = por %p247, %p248
      %p250 = scmp.ne.s32.totalorder %s236, %s237
      %p251 = scmp.eq.s32.totalorder %s32, 1
      %p252 = por %p250, %p251
      %p254 = scmp.ne.s32.totalorder %s237, %s253
      %p255 = scmp.eq.s32.totalorder %s32, 0
      %p256 = por %p254, %p255
      %p257 = scmp.le.s32.totalorder 1, %s26
      %p258 = scmp.lt.s32.totalorder %s26, 3
      %p259 = pnand %p257, %p258
      %p260 = pneg %p259
      // Predicated region
      $region9: #{tpu_custom_call.1} parent=5 // pred_check
        _
      $region10: #{tpu_custom_call.1} parent=5 // pred_check_branch
        %262 = sbr.rel (%p259) target = $region12
      $region11: #{tpu_custom_call.1} parent=5 // pred_region
        %s263 = ssub.s32 %s26, 1
        // Predicated region
        $region13: #{tpu_custom_call.1} parent=11 // pred_check
          %p264 = pneg %p87
        $region14: #{tpu_custom_call.1} parent=11 // pred_check_branch
          %266 = sbr.rel (%p264) target = $region16
        $region15: #{tpu_custom_call.1} parent=11 // pred_region
          %s268 = ssub.s32 2048, 2048
          %269 = vsyncadd [#allocation7], %s268
          %s270 = sshll.u32 [#allocation6], 4
          %s271 = int_to_ptr.vmem [resolvable:$true] %s270
          %276 = dma.hbm_to_vmem [thread:$0]  %s1, 2048, %s271, [#allocation7], 64, 64, 4
        $region16: #{tpu_custom_call.1} parent=11 // pred_fallthru
          _
        // Predicated region
        $region17: #{tpu_custom_call.1} parent=11 // pred_check
          %p277 = pneg %p134
        $region18: #{tpu_custom_call.1} parent=11 // pred_check_branch
          %279 = sbr.rel (%p277) target = $region20
        $region19: #{tpu_custom_call.1} parent=11 // pred_region
          %s281 = ssub.s32 3072, 3072
          %282 = vsyncadd [#allocation7], %s281
          %s283 = sshll.u32 [#allocation9], 4
          %s284 = int_to_ptr.vmem [resolvable:$true] %s283
          %289 = dma.hbm_to_vmem [thread:$0]  %s3, 3072, %s284, [#allocation7], 64, 64, 4
        $region20: #{tpu_custom_call.1} parent=11 // pred_fallthru
          _
        // Predicated region
        $region21: #{tpu_custom_call.1} parent=11 // pred_check
          %p290 = pneg %p155
        $region22: #{tpu_custom_call.1} parent=11 // pred_check_branch
          %292 = sbr.rel (%p290) target = $region24
        $region23: #{tpu_custom_call.1} parent=11 // pred_region
          %s294 = ssub.s32 1024, 1024
          %295 = vsyncadd [#allocation11], %s294
          %s296 = sshll.u32 [#allocation10], 4
          %s297 = int_to_ptr.vmem [resolvable:$true] %s296
          %302 = dma.hbm_to_vmem [thread:$0]  %s4, 1024, %s297, [#allocation11], 64, 64, 4
        $region24: #{tpu_custom_call.1} parent=11 // pred_fallthru
          _
        // Predicated region
        $region25: #{tpu_custom_call.1} parent=11 // pred_check
          %p303 = pneg %p176
        $region26: #{tpu_custom_call.1} parent=11 // pred_check_branch
          %305 = sbr.rel (%p303) target = $region28
        $region27: #{tpu_custom_call.1} parent=11 // pred_region
          %s307 = ssub.s32 1024, 1024
          %308 = vsyncadd [#allocation11], %s307
          %s309 = sshll.u32 [#allocation12], 4
          %s310 = int_to_ptr.vmem [resolvable:$true] %s309
          %315 = dma.hbm_to_vmem [thread:$0]  %s5, 1024, %s310, [#allocation11], 64, 64, 4
        $region28: #{tpu_custom_call.1} parent=11 // pred_fallthru
          _
        // Predicated region
        $region29: #{tpu_custom_call.1} parent=11 // pred_check
          %p316 = pneg %p197
        $region30: #{tpu_custom_call.1} parent=11 // pred_check_branch
          %318 = sbr.rel (%p316) target = $region32
        $region31: #{tpu_custom_call.1} parent=11 // pred_region
          _
        $region32: #{tpu_custom_call.1} parent=11 // pred_fallthru
          _
      $region12: #{tpu_custom_call.1} parent=5 // pred_fallthru
        _
      %p319 = scmp.lt.s32.totalorder %s26, 2
      // Predicated region
      $region33: #{tpu_custom_call.1} parent=5 // pred_check
        %p320 = pneg %p319
      $region34: #{tpu_custom_call.1} parent=5 // pred_check_branch
        %322 = sbr.rel (%p320) target = $region36
      $region35: #{tpu_custom_call.1} parent=5 // pred_region
        // Predicated region
        $region37: #{tpu_custom_call.1} parent=35 // pred_check
          %p323 = pneg %p60
        $region38: #{tpu_custom_call.1} parent=35 // pred_check_branch
          %325 = sbr.rel (%p323) target = $region40
        $region39: #{tpu_custom_call.1} parent=35 // pred_region
          #allocation17 [shape = 'u32[6]{0}', space=smem, size = 0x18, scoped, tag = 'DMA stride descriptor']
          %s326 = sand.u32 %s26, 1
          %s327 = scalar_lea.sflag [#allocation4], %s326
          %s328 = sand.u32 %s50, 1
          %s329 = smul.addr %s328, 240
          %s330 = scalar_lea.vmem [#allocation3], %s329
          %s331 = smul.u32 6, %s33
          %s332 = smul.u32 2, %s34
          %s334 = ssub.s32 3840, 3840
          %335 = vsyncadd %s327, %s334
          %s336 = smul.addr %s331, 2
          %s337 = sadd.s32 %s332, %s336
          %s338 = smul.addr %s337, 64
          %s339 = scalar_lea.hbm %s0, %s338
          %s341 = sshll.u32 1, 14
          %s342 = sxor.u32 4294967295, %s341
          %s344 = sld [smem:[#allocation0]]
          %s345 = sadd.s32 2, %s344
          %s347 = sshll.u32 7, 26
          %s348 = sxor.u32 4294967295, %s347
          %s349 = sand.u32 0, %s348
          %s350 = sshll.u32 %s345, 26
          %s351 = sor.u32 %s349, %s350
          %s352 = sshll.u32 %s330, 4
          %s353 = int_to_ptr.vmem [resolvable:$true] %s352
          %359 = sst [smem:[#allocation17]] 1536
          %s360 = scalar_lea.smem [#allocation17], 1
          %361 = sst [smem:[%s360]] 768
          %s362 = scalar_lea.smem [#allocation17], 2
          %363 = sst [smem:[%s362]] 6
          %s364 = scalar_lea.smem [#allocation17], 3
          %365 = sst [smem:[%s364]] 128
          %s366 = scalar_lea.smem [#allocation17], 4
          %367 = sst [smem:[%s366]] 128
          %s368 = scalar_lea.smem [#allocation17], 5
          %369 = sst [smem:[%s368]] 8
          %371 = dma.general %s339, 3840, %s353, %s327, [#allocation16], [#allocation17], %s351, 0
        $region40: #{tpu_custom_call.1} parent=35 // pred_fallthru
          _
        // Predicated region
        $region41: #{tpu_custom_call.1} parent=35 // pred_check
          %p372 = pneg %p107
        $region42: #{tpu_custom_call.1} parent=35 // pred_check_branch
          %374 = sbr.rel (%p372) target = $region44
        $region43: #{tpu_custom_call.1} parent=35 // pred_region
          %s375 = sand.u32 %s26, 1
          %s376 = scalar_lea.sflag [#allocation4], %s375
          %s377 = sand.u32 %s97, 1
          %s378 = smul.addr %s377, 48
          %s379 = scalar_lea.vmem [#allocation8], %s378
          %s380 = smul.u32 6, %s33
          %s382 = ssub.s32 768, 768
          %383 = vsyncadd %s376, %s382
          %s384 = smul.addr %s380, 128
          %s385 = scalar_lea.hbm %s2, %s384
          %s386 = sshll.u32 %s379, 4
          %s387 = int_to_ptr.vmem [resolvable:$true] %s386
          %392 = dma.hbm_to_vmem [thread:$0]  %s385, 768, %s387, %s376, 128, 128, 8
        $region44: #{tpu_custom_call.1} parent=35 // pred_fallthru
          _
      $region36: #{tpu_custom_call.1} parent=5 // pred_fallthru
        _
      %p393 = scmp.le.s32.totalorder 1, %s26
      %p394 = scmp.lt.s32.totalorder %s26, 3
      %p395 = pnand %p393, %p394
      %p396 = pneg %p395
      // Predicated region
      $region45: #{tpu_custom_call.1} parent=5 // pred_check
        _
      $region46: #{tpu_custom_call.1} parent=5 // pred_check_branch
        %398 = sbr.rel (%p395) target = $region48
      $region47: #{tpu_custom_call.1} parent=5 // pred_region
        %s399 = ssub.s32 %s26, 1
        %s400 = sand.u32 %s31, 1
        %s401 = scalar_lea.sflag [#allocation4], %s400
        %s402 = sand.u32 %s53, 1
        %s403 = smul.addr %s402, 240
        %s404 = scalar_lea.vmem [#allocation3], %s403
        // Predicated region
        $region49: #{tpu_custom_call.1} parent=47 // pred_check
          %p405 = pneg %p66
        $region50: #{tpu_custom_call.1} parent=47 // pred_check_branch
          %407 = sbr.rel (%p405) target = $region52
        $region51: #{tpu_custom_call.1} parent=47 // pred_region
          %408 = dma.done %s401, 3840
        $region52: #{tpu_custom_call.1} parent=47 // pred_fallthru
          _
        // Predicated region
        $region53: #{tpu_custom_call.1} parent=47 // pred_check
          %p409 = pneg %p87
        $region54: #{tpu_custom_call.1} parent=47 // pred_check_branch
          %411 = sbr.rel (%p409) target = $region56
        $region55: #{tpu_custom_call.1} parent=47 // pred_region
          %412 = dma.done [#allocation7], 2048
        $region56: #{tpu_custom_call.1} parent=47 // pred_fallthru
          _
        %s413 = sand.u32 %s31, 1
        %s414 = scalar_lea.sflag [#allocation4], %s413
        %s415 = sand.u32 %s100, 1
        %s416 = smul.addr %s415, 48
        %s417 = scalar_lea.vmem [#allocation8], %s416
        // Predicated region
        $region57: #{tpu_custom_call.1} parent=47 // pred_check
          %p418 = pneg %p113
        $region58: #{tpu_custom_call.1} parent=47 // pred_check_branch
          %420 = sbr.rel (%p418) target = $region60
        $region59: #{tpu_custom_call.1} parent=47 // pred_region
          %421 = dma.done %s414, 768
        $region60: #{tpu_custom_call.1} parent=47 // pred_fallthru
          _
        // Predicated region
        $region61: #{tpu_custom_call.1} parent=47 // pred_check
          %p422 = pneg %p134
        $region62: #{tpu_custom_call.1} parent=47 // pred_check_branch
          %424 = sbr.rel (%p422) target = $region64
        $region63: #{tpu_custom_call.1} parent=47 // pred_region
          %425 = dma.done [#allocation7], 3072
        $region64: #{tpu_custom_call.1} parent=47 // pred_fallthru
          _
        // Predicated region
        $region65: #{tpu_custom_call.1} parent=47 // pred_check
          %p426 = pneg %p155
        $region66: #{tpu_custom_call.1} parent=47 // pred_check_branch
          %428 = sbr.rel (%p426) target = $region68
        $region67: #{tpu_custom_call.1} parent=47 // pred_region
          %429 = dma.done [#allocation11], 1024
        $region68: #{tpu_custom_call.1} parent=47 // pred_fallthru
          _
        // Predicated region
        $region69: #{tpu_custom_call.1} parent=47 // pred_check
          %p430 = pneg %p176
        $region70: #{tpu_custom_call.1} parent=47 // pred_check_branch
          %432 = sbr.rel (%p430) target = $region72
        $region71: #{tpu_custom_call.1} parent=47 // pred_region
          %433 = dma.done [#allocation11], 1024
        $region72: #{tpu_custom_call.1} parent=47 // pred_fallthru
          _
        %s434 = sand.u32 %s31, 1
        %s435 = scalar_lea.sflag [#allocation4], %s434
        %s436 = sand.u32 %s53, 1
        %s437 = smul.addr %s436, 240
        %s438 = scalar_lea.vmem [#allocation3], %s437
        %p439 = pneg %p66
        %p440 = pneg %p63
        %p441 = pneg %p87
        %p442 = pneg %p84
        %s443 = sand.u32 %s31, 1
        %s444 = scalar_lea.sflag [#allocation4], %s443
        %s445 = sand.u32 %s100, 1
        %s446 = smul.addr %s445, 48
        %s447 = scalar_lea.vmem [#allocation8], %s446
        %p448 = pneg %p113
        %p449 = pneg %p110
        %p450 = pneg %p134
        %p451 = pneg %p131
        %p452 = pneg %p155
        %p453 = pneg %p152
        %p454 = pneg %p176
        %p455 = pneg %p173
        %p456 = pneg %p197
        %p457 = pneg %p194
        %p458 = pneg %p223
        %p459 = pneg %p220
        %s460 = sand.u32 %s210, 1
        %s461 = scalar_lea.sflag [#allocation5], %s460
        %s462 = sand.u32 %s210, 1
        %s463 = smul.addr %s462, 48
        %s464 = scalar_lea.vmem [#allocation13], %s463
        %p465 = pneg %p249
        %p466 = pneg %p246
        %s467 = sand.u32 %s236, 1
        %s468 = scalar_lea.sflag [#allocation15], %s467
        %s469 = sand.u32 %s236, 1
        %s470 = smul.addr %s469, 48
        %s471 = scalar_lea.vmem [#allocation14], %s470
        %s472 = smul.u32 6, %s35
        %s473 = smul.u32 2, %s36
        %s474 = smul.u32 6, %s35
        %s475 = smul.u32 6, %s35
        %s476 = smul.u32 6, %s35
        %p478 = scmp.eq.s32.totalorder %s36, 0
        // Predicated region
        $region73: #{tpu_custom_call.1} parent=47 // pred_check
          %p479 = pneg %p478
        $region74: #{tpu_custom_call.1} parent=47 // pred_check_branch
          %481 = sbr.rel (%p479) target = $region76
        $region75: #{tpu_custom_call.1} parent=47 // pred_region
          %482 = vst [vmem:[#allocation2] sm:$0xff] 0.0
          %483 = vst [vmem:[#allocation2 + $0x8] sm:$0xff] 0.0
          %484 = vst [vmem:[#allocation2 + $0x10] sm:$0xff] 0.0
          %485 = vst [vmem:[#allocation2 + $0x18] sm:$0xff] 0.0
          %486 = vst [vmem:[#allocation2 + $0x20] sm:$0xff] 0.0
          %487 = vst [vmem:[#allocation2 + $0x28] sm:$0xff] 0.0
          %488 = vst [vmem:[#allocation2 + $0x30] sm:$0xff] 0.0
          %489 = vst [vmem:[#allocation2 + $0x38] sm:$0xff] 0.0
          %490 = vst [vmem:[#allocation2 + $0x40] sm:$0xff] 0.0
          %491 = vst [vmem:[#allocation2 + $0x48] sm:$0xff] 0.0
          %492 = vst [vmem:[#allocation2 + $0x50] sm:$0xff] 0.0
          %493 = vst [vmem:[#allocation2 + $0x58] sm:$0xff] 0.0
          %494 = vst [vmem:[#allocation2 + $0x60] sm:$0xff] 0.0
          %495 = vst [vmem:[#allocation2 + $0x68] sm:$0xff] 0.0
          %496 = vst [vmem:[#allocation2 + $0x70] sm:$0xff] 0.0
          %497 = vst [vmem:[#allocation2 + $0x78] sm:$0xff] 0.0
          %498 = vst [vmem:[#allocation2 + $0x80] sm:$0xff] 0.0
          %499 = vst [vmem:[#allocation2 + $0x88] sm:$0xff] 0.0
          %500 = vst [vmem:[#allocation2 + $0x90] sm:$0xff] 0.0
          %501 = vst [vmem:[#allocation2 + $0x98] sm:$0xff] 0.0
          %502 = vst [vmem:[#allocation2 + $0xa0] sm:$0xff] 0.0
          %503 = vst [vmem:[#allocation2 + $0xa8] sm:$0xff] 0.0
          %504 = vst [vmem:[#allocation2 + $0xb0] sm:$0xff] 0.0
          %505 = vst [vmem:[#allocation2 + $0xb8] sm:$0xff] 0.0
          %506 = vst [vmem:[#allocation2 + $0xc0] sm:$0xff] 0.0
          %507 = vst [vmem:[#allocation2 + $0xc8] sm:$0xff] 0.0
          %508 = vst [vmem:[#allocation2 + $0xd0] sm:$0xff] 0.0
          %509 = vst [vmem:[#allocation2 + $0xd8] sm:$0xff] 0.0
          %510 = vst [vmem:[#allocation2 + $0xe0] sm:$0xff] 0.0
          %511 = vst [vmem:[#allocation2 + $0xe8] sm:$0xff] 0.0
        $region76: #{tpu_custom_call.1} parent=47 // pred_fallthru
          _
        %s512 = smul.u32 %s36, 256
        %s513 = sshra.s32 %s512, 3
        %s514 = sand.u32 %s512, 7
        %s515 = smul.addr %s513, 4
        %s516 = scalar_lea.vmem [#allocation6], %s515
        %v517 = vld [vmem:[%s516] sm:$0xf]
        %v518 = vld [vmem:[%s516 + $0x4] sm:$0xf]
        %v519 = vld [vmem:[%s516 + $0x8] sm:$0xf]
        %v520 = vld [vmem:[%s516 + $0xc] sm:$0xf]
        %v521 = vld [vmem:[%s516 + $0x10] sm:$0xf]
        %v522 = vld [vmem:[%s516 + $0x14] sm:$0xf]
        %v523 = vld [vmem:[%s516 + $0x18] sm:$0xf]
        %v524 = vld [vmem:[%s516 + $0x1c] sm:$0xf]
        %v525 = vld [vmem:[%s516 + $0x20] sm:$0xf]
        %v526 = vld [vmem:[%s516 + $0x24] sm:$0xf]
        %v527 = vld [vmem:[%s516 + $0x28] sm:$0xf]
        %v528 = vld [vmem:[%s516 + $0x2c] sm:$0xf]
        %v529 = vld [vmem:[%s516 + $0x30] sm:$0xf]
        %v530 = vld [vmem:[%s516 + $0x34] sm:$0xf]
        %v531 = vld [vmem:[%s516 + $0x38] sm:$0xf]
        %v532 = vld [vmem:[%s516 + $0x3c] sm:$0xf]
        %v533 = vld [vmem:[%s516 + $0x40] sm:$0xf]
        %v534 = vld [vmem:[%s516 + $0x44] sm:$0xf]
        %v535 = vld [vmem:[%s516 + $0x48] sm:$0xf]
        %v536 = vld [vmem:[%s516 + $0x4c] sm:$0xf]
        %v537 = vld [vmem:[%s516 + $0x50] sm:$0xf]
        %v538 = vld [vmem:[%s516 + $0x54] sm:$0xf]
        %v539 = vld [vmem:[%s516 + $0x58] sm:$0xf]
        %v540 = vld [vmem:[%s516 + $0x5c] sm:$0xf]
        %v541 = vld [vmem:[%s516 + $0x60] sm:$0xf]
        %v542 = vld [vmem:[%s516 + $0x64] sm:$0xf]
        %v543 = vld [vmem:[%s516 + $0x68] sm:$0xf]
        %v544 = vld [vmem:[%s516 + $0x6c] sm:$0xf]
        %v545 = vld [vmem:[%s516 + $0x70] sm:$0xf]
        %v546 = vld [vmem:[%s516 + $0x74] sm:$0xf]
        %v547 = vld [vmem:[%s516 + $0x78] sm:$0xf]
        %v548 = vld [vmem:[%s516 + $0x7c] sm:$0xf]
        %v549 = vld [vmem:[#allocation2] sm:$0xff]
        %v550 = vld [vmem:[#allocation2 + $0x28] sm:$0xff]
        %v551 = vld [vmem:[#allocation2 + $0x50] sm:$0xff]
        %v552 = vld [vmem:[#allocation2 + $0x78] sm:$0xff]
        %v553 = vld [vmem:[#allocation2 + $0xa0] sm:$0xff]
        %v554 = vld [vmem:[#allocation2 + $0xc8] sm:$0xff]
        %v555 = vld [vmem:[%s404] sm:$0xff]
        %v556 = vld [vmem:[%s404 + $0x8] sm:$0xff]
        %v557 = vld [vmem:[%s404 + $0x10] sm:$0xff]
        %v558 = vld [vmem:[%s404 + $0x18] sm:$0xff]
        %v559 = vld [vmem:[%s404 + $0x20] sm:$0xff]
        %v560 = vld [vmem:[%s404 + $0x28] sm:$0xff]
        %v567 = vunpack.c.l.b16 %v555
        %v568 = vunpack.c.h.b16 %v555
        %v569 = vunpack.c.l.b16 %v556
        %v570 = vunpack.c.h.b16 %v556
        %v571 = vunpack.c.l.b16 %v557
        %v572 = vunpack.c.h.b16 %v557
        %v573 = vunpack.c.l.b16 %v558
        %v574 = vunpack.c.h.b16 %v558
        %v575 = vunpack.c.l.b16 %v559
        %v576 = vunpack.c.h.b16 %v559
        %v577 = vunpack.c.l.b16 %v560
        %v578 = vunpack.c.h.b16 %v560
        %v579 = vpack.c.b16 %v569, %v567
        %v580 = vpack.c.b16 %v570, %v568
        %v581 = vpack.c.b16 %v573, %v571
        %v582 = vpack.c.b16 %v574, %v572
        %v583 = vpack.c.b16 %v577, %v575
        %v584 = vpack.c.b16 %v578, %v576
        %v623 = vunpack.c.l.b16 %v517
        %v624 = vunpack.c.l.b16 %v518
        %v625 = vunpack.c.l.b16 %v519
        %v626 = vunpack.c.l.b16 %v520
        %v627 = vunpack.c.l.b16 %v521
        %v628 = vunpack.c.l.b16 %v522
        %v629 = vunpack.c.l.b16 %v523
        %v630 = vunpack.c.l.b16 %v524
        %v631 = vunpack.c.l.b16 %v525
        %v632 = vunpack.c.l.b16 %v526
        %v633 = vunpack.c.l.b16 %v527
        %v634 = vunpack.c.l.b16 %v528
        %v635 = vunpack.c.l.b16 %v529
        %v636 = vunpack.c.l.b16 %v530
        %v637 = vunpack.c.l.b16 %v531
        %v638 = vunpack.c.l.b16 %v532
        %v639 = vunpack.c.l.b16 %v533
        %v640 = vunpack.c.l.b16 %v534
        %v641 = vunpack.c.l.b16 %v535
        %v642 = vunpack.c.l.b16 %v536
        %v643 = vunpack.c.l.b16 %v537
        %v644 = vunpack.c.l.b16 %v538
        %v645 = vunpack.c.l.b16 %v539
        %v646 = vunpack.c.l.b16 %v540
        %v647 = vunpack.c.l.b16 %v541
        %v648 = vunpack.c.l.b16 %v542
        %v649 = vunpack.c.l.b16 %v543
        %v650 = vunpack.c.l.b16 %v544
        %v651 = vunpack.c.l.b16 %v545
        %v652 = vunpack.c.l.b16 %v546
        %v653 = vunpack.c.l.b16 %v547
        %v654 = vunpack.c.l.b16 %v548
        %v655 = vpack.c.b16 %v624, %v623
        %v656 = vpack.c.b16 %v626, %v625
        %v657 = vpack.c.b16 %v628, %v627
        %v658 = vpack.c.b16 %v630, %v629
        %v659 = vpack.c.b16 %v632, %v631
        %v660 = vpack.c.b16 %v634, %v633
        %v661 = vpack.c.b16 %v636, %v635
        %v662 = vpack.c.b16 %v638, %v637
        %v663 = vpack.c.b16 %v640, %v639
        %v664 = vpack.c.b16 %v642, %v641
        %v665 = vpack.c.b16 %v644, %v643
        %v666 = vpack.c.b16 %v646, %v645
        %v667 = vpack.c.b16 %v648, %v647
        %v668 = vpack.c.b16 %v650, %v649
        %v669 = vpack.c.b16 %v652, %v651
        %v670 = vpack.c.b16 %v654, %v653
        %687 = vmatprep.subr.bf16.mxu0 0
        %688 = vmatpush1.bf16.msra.mxu0 %v655
        %689 = vmatprep.subr.bf16.mxu0 0
        %690 = vmatpush1.bf16.msra.mxu0 %v656
        %691 = vmatprep.subr.bf16.mxu0 0
        %692 = vmatpush1.bf16.msra.mxu0 %v657
        %693 = vmatprep.subr.bf16.mxu0 0
        %694 = vmatpush1.bf16.msra.mxu0 %v658
        %695 = vmatprep.subr.bf16.mxu0 0
        %696 = vmatpush1.bf16.msra.mxu0 %v659
        %697 = vmatprep.subr.bf16.mxu0 0
        %698 = vmatpush1.bf16.msra.mxu0 %v660
        %699 = vmatprep.subr.bf16.mxu0 0
        %700 = vmatpush1.bf16.msra.mxu0 %v661
        %701 = vmatprep.subr.bf16.mxu0 0
        %702 = vmatpush1.bf16.msra.mxu0 %v662
        %703 = vmatprep.subr.bf16.mxu0 0
        %704 = vmatpush1.bf16.msra.mxu0 %v663
        %705 = vmatprep.subr.bf16.mxu0 0
        %706 = vmatpush1.bf16.msra.mxu0 %v664
        %707 = vmatprep.subr.bf16.mxu0 0
        %708 = vmatpush1.bf16.msra.mxu0 %v665
        %709 = vmatprep.subr.bf16.mxu0 0
        %710 = vmatpush1.bf16.msra.mxu0 %v666
        %711 = vmatprep.subr.bf16.mxu0 0
        %712 = vmatpush1.bf16.msra.mxu0 %v667
        %713 = vmatprep.subr.bf16.mxu0 0
        %714 = vmatpush1.bf16.msra.mxu0 %v668
        %715 = vmatprep.subr.bf16.mxu0 0
        %716 = vmatpush1.bf16.msra.mxu0 %v669
        %717 = vmatprep.subr.bf16.mxu0 0
        %718 = vmatpush1.bf16.msra.mxu0 %v670
        %719 = vmatprep.mubr.bf16.mxu0 %v580
        %720 = vmatmul.mubr.bf16.gmra.mrb[0].mxu0 %v579
        %v721 = vpop.f32.mrb[0].mxu0
        %v722 = vadd.f32 0.0, %v721
        %v723 = vpop.f32.mrb[0].mxu0
        %v724 = vpop.f32.mrb[0].mxu0
        %v725 = vadd.f32 0.0, %v724
        %v726 = vpop.f32.mrb[0].mxu0
        %727 = vmatprep.mubr.bf16.mxu0 %v582
        %728 = vmatmul.mubr.bf16.gmra.mrb[0].mxu0 %v581
        %v729 = vpop.f32.mrb[0].mxu0
        %v730 = vadd.f32 0.0, %v729
        %v731 = vpop.f32.mrb[0].mxu0
        %v732 = vpop.f32.mrb[0].mxu0
        %v733 = vadd.f32 0.0, %v732
        %v734 = vpop.f32.mrb[0].mxu0
        %735 = vmatprep.mubr.bf16.mxu0 %v584
        %736 = vmatmul.mubr.bf16.gmra.mrb[0].mxu0 %v583
        %v737 = vpop.f32.mrb[0].mxu0
        %v738 = vadd.f32 0.0, %v737
        %v739 = vpop.f32.mrb[0].mxu0
        %v740 = vpop.f32.mrb[0].mxu0
        %v741 = vadd.f32 0.0, %v740
        %v742 = vpop.f32.mrb[0].mxu0
        %743 = vdwg.mxu0
        %v744 = vadd.f32 %v549, %v722
        %v745 = vadd.f32 %v550, %v725
        %v746 = vadd.f32 %v551, %v730
        %v747 = vadd.f32 %v552, %v733
        %v748 = vadd.f32 %v553, %v738
        %v749 = vadd.f32 %v554, %v741
        %750 = vst [vmem:[#allocation2] sm:$0xff] %v744
        %751 = vst [vmem:[#allocation2 + $0x28] sm:$0xff] %v745
        %752 = vst [vmem:[#allocation2 + $0x50] sm:$0xff] %v746
        %753 = vst [vmem:[#allocation2 + $0x78] sm:$0xff] %v747
        %754 = vst [vmem:[#allocation2 + $0xa0] sm:$0xff] %v748
        %755 = vst [vmem:[#allocation2 + $0xc8] sm:$0xff] %v749
        %v756 = vld [vmem:[#allocation2 + $0x8] sm:$0xff]
        %v757 = vld [vmem:[#allocation2 + $0x30] sm:$0xff]
        %v758 = vld [vmem:[#allocation2 + $0x58] sm:$0xff]
        %v759 = vld [vmem:[#allocation2 + $0x80] sm:$0xff]
        %v760 = vld [vmem:[#allocation2 + $0xa8] sm:$0xff]
        %v761 = vld [vmem:[#allocation2 + $0xd0] sm:$0xff]
        %s762 = scalar_lea.vmem %s404, 48 [#allocation3]
        %v763 = vld [vmem:[%s762] sm:$0xff]
        %v764 = vld [vmem:[%s762 + $0x8] sm:$0xff]
        %v765 = vld [vmem:[%s762 + $0x10] sm:$0xff]
        %v766 = vld [vmem:[%s762 + $0x18] sm:$0xff]
        %v767 = vld [vmem:[%s762 + $0x20] sm:$0xff]
        %v768 = vld [vmem:[%s762 + $0x28] sm:$0xff]
        %v775 = vunpack.c.l.b16 %v763
        %v776 = vunpack.c.h.b16 %v763
        %v777 = vunpack.c.l.b16 %v764
        %v778 = vunpack.c.h.b16 %v764
        %v779 = vunpack.c.l.b16 %v765
        %v780 = vunpack.c.h.b16 %v765
        %v781 = vunpack.c.l.b16 %v766
        %v782 = vunpack.c.h.b16 %v766
        %v783 = vunpack.c.l.b16 %v767
        %v784 = vunpack.c.h.b16 %v767
        %v785 = vunpack.c.l.b16 %v768
        %v786 = vunpack.c.h.b16 %v768
        %v787 = vpack.c.b16 %v777, %v775
        %v788 = vpack.c.b16 %v778, %v776
        %v789 = vpack.c.b16 %v781, %v779
        %v790 = vpack.c.b16 %v782, %v780
        %v791 = vpack.c.b16 %v785, %v783
        %v792 = vpack.c.b16 %v786, %v784
        %799 = vmatprep.subr.bf16.mxu0 0
        %800 = vmatpush1.bf16.msra.mxu0 %v655
        %801 = vmatprep.subr.bf16.mxu0 0
        %802 = vmatpush1.bf16.msra.mxu0 %v656
        %803 = vmatprep.subr.bf16.mxu0 0
        %804 = vmatpush1.bf16.msra.mxu0 %v657
        %805 = vmatprep.subr.bf16.mxu0 0
        %806 = vmatpush1.bf16.msra.mxu0 %v658
        %807 = vmatprep.subr.bf16.mxu0 0
        %808 = vmatpush1.bf16.msra.mxu0 %v659
        %809 = vmatprep.subr.bf16.mxu0 0
        %810 = vmatpush1.bf16.msra.mxu0 %v660
        %811 = vmatprep.subr.bf16.mxu0 0
        %812 = vmatpush1.bf16.msra.mxu0 %v661
        %813 = vmatprep.subr.bf16.mxu0 0
        %814 = vmatpush1.bf16.msra.mxu0 %v662
        %815 = vmatprep.subr.bf16.mxu0 0
        %816 = vmatpush1.bf16.msra.mxu0 %v663
        %817 = vmatprep.subr.bf16.mxu0 0
        %818 = vmatpush1.bf16.msra.mxu0 %v664
        %819 = vmatprep.subr.bf16.mxu0 0
        %820 = vmatpush1.bf16.msra.mxu0 %v665
        %821 = vmatprep.subr.bf16.mxu0 0
        %822 = vmatpush1.bf16.msra.mxu0 %v666
        %823 = vmatprep.subr.bf16.mxu0 0
        %824 = vmatpush1.bf16.msra.mxu0 %v667
        %825 = vmatprep.subr.bf16.mxu0 0
        %826 = vmatpush1.bf16.msra.mxu0 %v668
        %827 = vmatprep.subr.bf16.mxu0 0
        %828 = vmatpush1.bf16.msra.mxu0 %v669
        %829 = vmatprep.subr.bf16.mxu0 0
        %830 = vmatpush1.bf16.msra.mxu0 %v670
        %831 = vmatprep.mubr.bf16.mxu0 %v788
        %832 = vmatmul.mubr.bf16.gmra.mrb[0].mxu0 %v787
        %v833 = vpop.f32.mrb[0].mxu0
        %v834 = vadd.f32 0.0, %v833
        %v835 = vpop.f32.mrb[0].mxu0
        %v836 = vpop.f32.mrb[0].mxu0
        %v837 = vadd.f32 0.0, %v836
        %v838 = vpop.f32.mrb[0].mxu0
        %839 = vmatprep.mubr.bf16.mxu0 %v790
        %840 = vmatmul.mubr.bf16.gmra.mrb[0].mxu0 %v789
        %v841 = vpop.f32.mrb[0].mxu0
        %v842 = vadd.f32 0.0, %v841
        %v843 = vpop.f32.mrb[0].mxu0
        %v844 = vpop.f32.mrb[0].mxu0
        %v845 = vadd.f32 0.0, %v844
        %v846 = vpop.f32.mrb[0].mxu0
        %847 = vmatprep.mubr.bf16.mxu0 %v792
        %848 = vmatmul.mubr.bf16.gmra.mrb[0].mxu0 %v791
        %v849 = vpop.f32.mrb[0].mxu0
        %v850 = vadd.f32 0.0, %v849
        %v851 = vpop.f32.mrb[0].mxu0
        %v852 = vpop.f32.mrb[0].mxu0
        %v853 = vadd.f32 0.0, %v852
        %v854 = vpop.f32.mrb[0].mxu0
        %855 = vdwg.mxu0
        %v856 = vadd.f32 %v756, %v834
        %v857 = vadd.f32 %v757, %v837
        %v858 = vadd.f32 %v758, %v842
        %v859 = vadd.f32 %v759, %v845
        %v860 = vadd.f32 %v760, %v850
        %v861 = vadd.f32 %v761, %v853
        %862 = vst [vmem:[#allocation2 + $0x8] sm:$0xff] %v856
        %863 = vst [vmem:[#allocation2 + $0x30] sm:$0xff] %v857
        %864 = vst [vmem:[#allocation2 + $0x58] sm:$0xff] %v858
        %865 = vst [vmem:[#allocation2 + $0x80] sm:$0xff] %v859
        %866 = vst [vmem:[#allocation2 + $0xa8] sm:$0xff] %v860
        %867 = vst [vmem:[#allocation2 + $0xd0] sm:$0xff] %v861
        %v868 = vld [vmem:[#allocation2 + $0x10] sm:$0xff]
        %v869 = vld [vmem:[#allocation2 + $0x38] sm:$0xff]
        %v870 = vld [vmem:[#allocation2 + $0x60] sm:$0xff]
        %v871 = vld [vmem:[#allocation2 + $0x88] sm:$0xff]
        %v872 = vld [vmem:[#allocation2 + $0xb0] sm:$0xff]
        %v873 = vld [vmem:[#allocation2 + $0xd8] sm:$0xff]
        %s874 = scalar_lea.vmem %s404, 96 [#allocation3]
        %v875 = vld [vmem:[%s874] sm:$0xff]
        %v876 = vld [vmem:[%s874 + $0x8] sm:$0xff]
        %v877 = vld [vmem:[%s874 + $0x10] sm:$0xff]
        %v878 = vld [vmem:[%s874 + $0x18] sm:$0xff]
        %v879 = vld [vmem:[%s874 + $0x20] sm:$0xff]
        %v880 = vld [vmem:[%s874 + $0x28] sm:$0xff]
        %v887 = vunpack.c.l.b16 %v875
        %v888 = vunpack.c.h.b16 %v875
        %v889 = vunpack.c.l.b16 %v876
        %v890 = vunpack.c.h.b16 %v876
        %v891 = vunpack.c.l.b16 %v877
        %v892 = vunpack.c.h.b16 %v877
        %v893 = vunpack.c.l.b16 %v878
        %v894 = vunpack.c.h.b16 %v878
        %v895 = vunpack.c.l.b16 %v879
        %v896 = vunpack.c.h.b16 %v879
        %v897 = vunpack.c.l.b16 %v880
        %v898 = vunpack.c.h.b16 %v880
        %v899 = vpack.c.b16 %v889, %v887
        %v900 = vpack.c.b16 %v890, %v888
        %v901 = vpack.c.b16 %v893, %v891
        %v902 = vpack.c.b16 %v894, %v892
        %v903 = vpack.c.b16 %v897, %v895
        %v904 = vpack.c.b16 %v898, %v896
        %911 = vmatprep.subr.bf16.mxu0 0
        %912 = vmatpush1.bf16.msra.mxu0 %v655
        %913 = vmatprep.subr.bf16.mxu0 0
        %914 = vmatpush1.bf16.msra.mxu0 %v656
        %915 = vmatprep.subr.bf16.mxu0 0
        %916 = vmatpush1.bf16.msra.mxu0 %v657
        %917 = vmatprep.subr.bf16.mxu0 0
        %918 = vmatpush1.bf16.msra.mxu0 %v658
        %919 = vmatprep.subr.bf16.mxu0 0
        %920 = vmatpush1.bf16.msra.mxu0 %v659
        %921 = vmatprep.subr.bf16.mxu0 0
        %922 = vmatpush1.bf16.msra.mxu0 %v660
        %923 = vmatprep.subr.bf16.mxu0 0
        %924 = vmatpush1.bf16.msra.mxu0 %v661
        %925 = vmatprep.subr.bf16.mxu0 0
        %926 = vmatpush1.bf16.msra.mxu0 %v662
        %927 = vmatprep.subr.bf16.mxu0 0
        %928 = vmatpush1.bf16.msra.mxu0 %v663
        %929 = vmatprep.subr.bf16.mxu0 0
        %930 = vmatpush1.bf16.msra.mxu0 %v664
        %931 = vmatprep.subr.bf16.mxu0 0
        %932 = vmatpush1.bf16.msra.mxu0 %v665
        %933 = vmatprep.subr.bf16.mxu0 0
        %934 = vmatpush1.bf16.msra.mxu0 %v666
        %935 = vmatprep.subr.bf16.mxu0 0
        %936 = vmatpush1.bf16.msra.mxu0 %v667
        %937 = vmatprep.subr.bf16.mxu0 0
        %938 = vmatpush1.bf16.msra.mxu0 %v668
        %939 = vmatprep.subr.bf16.mxu0 0
        %940 = vmatpush1.bf16.msra.mxu0 %v669
        %941 = vmatprep.subr.bf16.mxu0 0
        %942 = vmatpush1.bf16.msra.mxu0 %v670
        %943 = vmatprep.mubr.bf16.mxu0 %v900
        %944 = vmatmul.mubr.bf16.gmra.mrb[0].mxu0 %v899
        %v945 = vpop.f32.mrb[0].mxu0
        %v946 = vadd.f32 0.0, %v945
        %v947 = vpop.f32.mrb[0].mxu0
        %v948 = vpop.f32.mrb[0].mxu0
        %v949 = vadd.f32 0.0, %v948
        %v950 = vpop.f32.mrb[0].mxu0
        %951 = vmatprep.mubr.bf16.mxu0 %v902
        %952 = vmatmul.mubr.bf16.gmra.mrb[0].mxu0 %v901
        %v953 = vpop.f32.mrb[0].mxu0
        %v954 = vadd.f32 0.0, %v953
        %v955 = vpop.f32.mrb[0].mxu0
        %v956 = vpop.f32.mrb[0].mxu0
        %v957 = vadd.f32 0.0, %v956
        %v958 = vpop.f32.mrb[0].mxu0
        %959 = vmatprep.mubr.bf16.mxu0 %v904
        %960 = vmatmul.mubr.bf16.gmra.mrb[0].mxu0 %v903
        %v961 = vpop.f32.mrb[0].mxu0
        %v962 = vadd.f32 0.0, %v961
        %v963 = vpop.f32.mrb[0].mxu0
        %v964 = vpop.f32.mrb[0].mxu0
        %v965 = vadd.f32 0.0, %v964
        %v966 = vpop.f32.mrb[0].mxu0
        %967 = vdwg.mxu0
        %v968 = vadd.f32 %v868, %v946
        %v969 = vadd.f32 %v869, %v949
        %v970 = vadd.f32 %v870, %v954
        %v971 = vadd.f32 %v871, %v957
        %v972 = vadd.f32 %v872, %v962
        %v973 = vadd.f32 %v873, %v965
        %974 = vst [vmem:[#allocation2 + $0x10] sm:$0xff] %v968
        %975 = vst [vmem:[#allocation2 + $0x38] sm:$0xff] %v969
        %976 = vst [vmem:[#allocation2 + $0x60] sm:$0xff] %v970
        %977 = vst [vmem:[#allocation2 + $0x88] sm:$0xff] %v971
        %978 = vst [vmem:[#allocation2 + $0xb0] sm:$0xff] %v972
        %979 = vst [vmem:[#allocation2 + $0xd8] sm:$0xff] %v973
        %v980 = vld [vmem:[#allocation2 + $0x18] sm:$0xff]
        %v981 = vld [vmem:[#allocation2 + $0x40] sm:$0xff]
        %v982 = vld [vmem:[#allocation2 + $0x68] sm:$0xff]
        %v983 = vld [vmem:[#allocation2 + $0x90] sm:$0xff]
        %v984 = vld [vmem:[#allocation2 + $0xb8] sm:$0xff]
        %v985 = vld [vmem:[#allocation2 + $0xe0] sm:$0xff]
        %s986 = scalar_lea.vmem %s404, 144 [#allocation3]
        %v987 = vld [vmem:[%s986] sm:$0xff]
        %v988 = vld [vmem:[%s986 + $0x8] sm:$0xff]
        %v989 = vld [vmem:[%s986 + $0x10] sm:$0xff]
        %v990 = vld [vmem:[%s986 + $0x18] sm:$0xff]
        %v991 = vld [vmem:[%s986 + $0x20] sm:$0xff]
        %v992 = vld [vmem:[%s986 + $0x28] sm:$0xff]
        %v999 = vunpack.c.l.b16 %v987
        %v1000 = vunpack.c.h.b16 %v987
        %v1001 = vunpack.c.l.b16 %v988
        %v1002 = vunpack.c.h.b16 %v988
        %v1003 = vunpack.c.l.b16 %v989
        %v1004 = vunpack.c.h.b16 %v989
        %v1005 = vunpack.c.l.b16 %v990
        %v1006 = vunpack.c.h.b16 %v990
        %v1007 = vunpack.c.l.b16 %v991
        %v1008 = vunpack.c.h.b16 %v991
        %v1009 = vunpack.c.l.b16 %v992
        %v1010 = vunpack.c.h.b16 %v992
        %v1011 = vpack.c.b16 %v1001, %v999
        %v1012 = vpack.c.b16 %v1002, %v1000
        %v1013 = vpack.c.b16 %v1005, %v1003
        %v1014 = vpack.c.b16 %v1006, %v1004
        %v1015 = vpack.c.b16 %v1009, %v1007
        %v1016 = vpack.c.b16 %v1010, %v1008
        %1023 = vmatprep.subr.bf16.mxu0 0
        %1024 = vmatpush1.bf16.msra.mxu0 %v655
        %1025 = vmatprep.subr.bf16.mxu0 0
        %1026 = vmatpush1.bf16.msra.mxu0 %v656
        %1027 = vmatprep.subr.bf16.mxu0 0
        %1028 = vmatpush1.bf16.msra.mxu0 %v657
        %1029 = vmatprep.subr.bf16.mxu0 0
        %1030 = vmatpush1.bf16.msra.mxu0 %v658
        %1031 = vmatprep.subr.bf16.mxu0 0
        %1032 = vmatpush1.bf16.msra.mxu0 %v659
        %1033 = vmatprep.subr.bf16.mxu0 0
        %1034 = vmatpush1.bf16.msra.mxu0 %v660
        %1035 = vmatprep.subr.bf16.mxu0 0
        %1036 = vmatpush1.bf16.msra.mxu0 %v661
        %1037 = vmatprep.subr.bf16.mxu0 0
        %1038 = vmatpush1.bf16.msra.mxu0 %v662
        %1039 = vmatprep.subr.bf16.mxu0 0
        %1040 = vmatpush1.bf16.msra.mxu0 %v663
        %1041 = vmatprep.subr.bf16.mxu0 0
        %1042 = vmatpush1.bf16.msra.mxu0 %v664
        %1043 = vmatprep.subr.bf16.mxu0 0
        %1044 = vmatpush1.bf16.msra.mxu0 %v665
        %1045 = vmatprep.subr.bf16.mxu0 0
        %1046 = vmatpush1.bf16.msra.mxu0 %v666
        %1047 = vmatprep.subr.bf16.mxu0 0
        %1048 = vmatpush1.bf16.msra.mxu0 %v667
        %1049 = vmatprep.subr.bf16.mxu0 0
        %1050 = vmatpush1.bf16.msra.mxu0 %v668
        %1051 = vmatprep.subr.bf16.mxu0 0
        %1052 = vmatpush1.bf16.msra.mxu0 %v669
        %1053 = vmatprep.subr.bf16.mxu0 0
        %1054 = vmatpush1.bf16.msra.mxu0 %v670
        %1055 = vmatprep.mubr.bf16.mxu0 %v1012
        %1056 = vmatmul.mubr.bf16.gmra.mrb[0].mxu0 %v1011
        %v1057 = vpop.f32.mrb[0].mxu0
        %v1058 = vadd.f32 0.0, %v1057
        %v1059 = vpop.f32.mrb[0].mxu0
        %v1060 = vpop.f32.mrb[0].mxu0
        %v1061 = vadd.f32 0.0, %v1060
        %v1062 = vpop.f32.mrb[0].mxu0
        %1063 = vmatprep.mubr.bf16.mxu0 %v1014
        %1064 = vmatmul.mubr.bf16.gmra.mrb[0].mxu0 %v1013
        %v1065 = vpop.f32.mrb[0].mxu0
        %v1066 = vadd.f32 0.0, %v1065
        %v1067 = vpop.f32.mrb[0].mxu0
        %v1068 = vpop.f32.mrb[0].mxu0
        %v1069 = vadd.f32 0.0, %v1068
        %v1070 = vpop.f32.mrb[0].mxu0
        %1071 = vmatprep.mubr.bf16.mxu0 %v1016
        %1072 = vmatmul.mubr.bf16.gmra.mrb[0].mxu0 %v1015
        %v1073 = vpop.f32.mrb[0].mxu0
        %v1074 = vadd.f32 0.0, %v1073
        %v1075 = vpop.f32.mrb[0].mxu0
        %v1076 = vpop.f32.mrb[0].mxu0
        %v1077 = vadd.f32 0.0, %v1076
        %v1078 = vpop.f32.mrb[0].mxu0
        %1079 = vdwg.mxu0
        %v1080 = vadd.f32 %v980, %v1058
        %v1081 = vadd.f32 %v981, %v1061
        %v1082 = vadd.f32 %v982, %v1066
        %v1083 = vadd.f32 %v983, %v1069
        %v1084 = vadd.f32 %v984, %v1074
        %v1085 = vadd.f32 %v985, %v1077
        %1086 = vst [vmem:[#allocation2 + $0x18] sm:$0xff] %v1080
        %1087 = vst [vmem:[#allocation2 + $0x40] sm:$0xff] %v1081
        %1088 = vst [vmem:[#allocation2 + $0x68] sm:$0xff] %v1082
        %1089 = vst [vmem:[#allocation2 + $0x90] sm:$0xff] %v1083
        %1090 = vst [vmem:[#allocation2 + $0xb8] sm:$0xff] %v1084
        %1091 = vst [vmem:[#allocation2 + $0xe0] sm:$0xff] %v1085
        %v1092 = vld [vmem:[#allocation2 + $0x20] sm:$0xff]
        %v1093 = vld [vmem:[#allocation2 + $0x48] sm:$0xff]
        %v1094 = vld [vmem:[#allocation2 + $0x70] sm:$0xff]
        %v1095 = vld [vmem:[#allocation2 + $0x98] sm:$0xff]
        %v1096 = vld [vmem:[#allocation2 + $0xc0] sm:$0xff]
        %v1097 = vld [vmem:[#allocation2 + $0xe8] sm:$0xff]
        %s1098 = scalar_lea.vmem %s404, 192 [#allocation3]
        %v1099 = vld [vmem:[%s1098] sm:$0xff]
        %v1100 = vld [vmem:[%s1098 + $0x8] sm:$0xff]
        %v1101 = vld [vmem:[%s1098 + $0x10] sm:$0xff]
        %v1102 = vld [vmem:[%s1098 + $0x18] sm:$0xff]
        %v1103 = vld [vmem:[%s1098 + $0x20] sm:$0xff]
        %v1104 = vld [vmem:[%s1098 + $0x28] sm:$0xff]
        %v1111 = vunpack.c.l.b16 %v1099
        %v1112 = vunpack.c.h.b16 %v1099
        %v1113 = vunpack.c.l.b16 %v1100
        %v1114 = vunpack.c.h.b16 %v1100
        %v1115 = vunpack.c.l.b16 %v1101
        %v1116 = vunpack.c.h.b16 %v1101
        %v1117 = vunpack.c.l.b16 %v1102
        %v1118 = vunpack.c.h.b16 %v1102
        %v1119 = vunpack.c.l.b16 %v1103
        %v1120 = vunpack.c.h.b16 %v1103
        %v1121 = vunpack.c.l.b16 %v1104
        %v1122 = vunpack.c.h.b16 %v1104
        %v1123 = vpack.c.b16 %v1113, %v1111
        %v1124 = vpack.c.b16 %v1114, %v1112
        %v1125 = vpack.c.b16 %v1117, %v1115
        %v1126 = vpack.c.b16 %v1118, %v1116
        %v1127 = vpack.c.b16 %v1121, %v1119
        %v1128 = vpack.c.b16 %v1122, %v1120
        %1135 = vmatprep.subr.bf16.mxu0 0
        %1136 = vmatpush1.bf16.msra.mxu0 %v655
        %1137 = vmatprep.subr.bf16.mxu0 0
        %1138 = vmatpush1.bf16.msra.mxu0 %v656
        %1139 = vmatprep.subr.bf16.mxu0 0
        %1140 = vmatpush1.bf16.msra.mxu0 %v657
        %1141 = vmatprep.subr.bf16.mxu0 0
        %1142 = vmatpush1.bf16.msra.mxu0 %v658
        %1143 = vmatprep.subr.bf16.mxu0 0
        %1144 = vmatpush1.bf16.msra.mxu0 %v659
        %1145 = vmatprep.subr.bf16.mxu0 0
        %1146 = vmatpush1.bf16.msra.mxu0 %v660
        %1147 = vmatprep.subr.bf16.mxu0 0
        %1148 = vmatpush1.bf16.msra.mxu0 %v661
        %1149 = vmatprep.subr.bf16.mxu0 0
        %1150 = vmatpush1.bf16.msra.mxu0 %v662
        %1151 = vmatprep.subr.bf16.mxu0 0
        %1152 = vmatpush1.bf16.msra.mxu0 %v663
        %1153 = vmatprep.subr.bf16.mxu0 0
        %1154 = vmatpush1.bf16.msra.mxu0 %v664
        %1155 = vmatprep.subr.bf16.mxu0 0
        %1156 = vmatpush1.bf16.msra.mxu0 %v665
        %1157 = vmatprep.subr.bf16.mxu0 0
        %1158 = vmatpush1.bf16.msra.mxu0 %v666
        %1159 = vmatprep.subr.bf16.mxu0 0
        %1160 = vmatpush1.bf16.msra.mxu0 %v667
        %1161 = vmatprep.subr.bf16.mxu0 0
        %1162 = vmatpush1.bf16.msra.mxu0 %v668
        %1163 = vmatprep.subr.bf16.mxu0 0
        %1164 = vmatpush1.bf16.msra.mxu0 %v669
        %1165 = vmatprep.subr.bf16.mxu0 0
        %1166 = vmatpush1.bf16.msra.mxu0 %v670
        %1167 = vmatprep.mubr.bf16.mxu0 %v1124
        %1168 = vmatmul.mubr.bf16.gmra.mrb[0].mxu0 %v1123
        %v1169 = vpop.f32.mrb[0].mxu0
        %v1170 = vadd.f32 0.0, %v1169
        %v1171 = vpop.f32.mrb[0].mxu0
        %v1172 = vpop.f32.mrb[0].mxu0
        %v1173 = vadd.f32 0.0, %v1172
        %v1174 = vpop.f32.mrb[0].mxu0
        %1175 = vmatprep.mubr.bf16.mxu0 %v1126
        %1176 = vmatmul.mubr.bf16.gmra.mrb[0].mxu0 %v1125
        %v1177 = vpop.f32.mrb[0].mxu0
        %v1178 = vadd.f32 0.0, %v1177
        %v1179 = vpop.f32.mrb[0].mxu0
        %v1180 = vpop.f32.mrb[0].mxu0
        %v1181 = vadd.f32 0.0, %v1180
        %v1182 = vpop.f32.mrb[0].mxu0
        %1183 = vmatprep.mubr.bf16.mxu0 %v1128
        %1184 = vmatmul.mubr.bf16.gmra.mrb[0].mxu0 %v1127
        %v1185 = vpop.f32.mrb[0].mxu0
        %v1186 = vadd.f32 0.0, %v1185
        %v1187 = vpop.f32.mrb[0].mxu0
        %v1188 = vpop.f32.mrb[0].mxu0
        %v1189 = vadd.f32 0.0, %v1188
        %v1190 = vpop.f32.mrb[0].mxu0
        %1191 = vdwg.mxu0
        %v1192 = vadd.f32 %v1092, %v1170
        %v1193 = vadd.f32 %v1093, %v1173
        %v1194 = vadd.f32 %v1094, %v1178
        %v1195 = vadd.f32 %v1095, %v1181
        %v1196 = vadd.f32 %v1096, %v1186
        %v1197 = vadd.f32 %v1097, %v1189
        %1198 = vst [vmem:[#allocation2 + $0x20] sm:$0xff] %v1192
        %1199 = vst [vmem:[#allocation2 + $0x48] sm:$0xff] %v1193
        %1200 = vst [vmem:[#allocation2 + $0x70] sm:$0xff] %v1194
        %1201 = vst [vmem:[#allocation2 + $0x98] sm:$0xff] %v1195
        %1202 = vst [vmem:[#allocation2 + $0xc0] sm:$0xff] %v1196
        %1203 = vst [vmem:[#allocation2 + $0xe8] sm:$0xff] %v1197
        // Predicated region
        $region77: #{tpu_custom_call.1} parent=47 // pred_check
          %p1204 = pneg %p478
        $region78: #{tpu_custom_call.1} parent=47 // pred_check_branch
          %1206 = sbr.rel (%p1204) target = $region80
        $region79: #{tpu_custom_call.1} parent=47 // pred_region
          %v1207 = vld [vmem:[#allocation2] sm:$0xff]
          %v1208 = vld [vmem:[#allocation2 + $0x8] sm:$0xff]
          %v1209 = vld [vmem:[#allocation2 + $0x10] sm:$0xff]
          %v1210 = vld [vmem:[#allocation2 + $0x18] sm:$0xff]
          %v1211 = vld [vmem:[#allocation2 + $0x20] sm:$0xff]
          %v1212 = vld [vmem:[#allocation2 + $0x28] sm:$0xff]
          %v1213 = vld [vmem:[#allocation2 + $0x30] sm:$0xff]
          %v1214 = vld [vmem:[#allocation2 + $0x38] sm:$0xff]
          %v1215 = vld [vmem:[#allocation2 + $0x40] sm:$0xff]
          %v1216 = vld [vmem:[#allocation2 + $0x48] sm:$0xff]
          %v1217 = vld [vmem:[#allocation2 + $0x50] sm:$0xff]
          %v1218 = vld [vmem:[#allocation2 + $0x58] sm:$0xff]
          %v1219 = vld [vmem:[#allocation2 + $0x60] sm:$0xff]
          %v1220 = vld [vmem:[#allocation2 + $0x68] sm:$0xff]
          %v1221 = vld [vmem:[#allocation2 + $0x70] sm:$0xff]
          %v1222 = vld [vmem:[#allocation2 + $0x78] sm:$0xff]
          %v1223 = vld [vmem:[#allocation2 + $0x80] sm:$0xff]
          %v1224 = vld [vmem:[#allocation2 + $0x88] sm:$0xff]
          %v1225 = vld [vmem:[#allocation2 + $0x90] sm:$0xff]
          %v1226 = vld [vmem:[#allocation2 + $0x98] sm:$0xff]
          %v1227 = vld [vmem:[#allocation2 + $0xa0] sm:$0xff]
          %v1228 = vld [vmem:[#allocation2 + $0xa8] sm:$0xff]
          %v1229 = vld [vmem:[#allocation2 + $0xb0] sm:$0xff]
          %v1230 = vld [vmem:[#allocation2 + $0xb8] sm:$0xff]
          %v1231 = vld [vmem:[#allocation2 + $0xc0] sm:$0xff]
          %v1232 = vld [vmem:[#allocation2 + $0xc8] sm:$0xff]
          %v1233 = vld [vmem:[#allocation2 + $0xd0] sm:$0xff]
          %v1234 = vld [vmem:[#allocation2 + $0xd8] sm:$0xff]
          %v1235 = vld [vmem:[#allocation2 + $0xe0] sm:$0xff]
          %v1236 = vld [vmem:[#allocation2 + $0xe8] sm:$0xff]
          %v1237 = vpack.c.bf16 %v1212, %v1207
          %v1238 = vpack.c.bf16 %v1213, %v1208
          %v1239 = vpack.c.bf16 %v1214, %v1209
          %v1240 = vpack.c.bf16 %v1222, %v1217
          %v1241 = vpack.c.bf16 %v1223, %v1218
          %v1242 = vpack.c.bf16 %v1224, %v1219
          %v1243 = vpack.c.bf16 %v1232, %v1227
          %v1244 = vpack.c.bf16 %v1233, %v1228
          %v1245 = vpack.c.bf16 %v1234, %v1229
          %v1246 = vld [vmem:[#allocation9] sm:$0xf]
          %v1247 = vld [vmem:[#allocation9 + $0x4] sm:$0xf]
          %v1248 = vld [vmem:[#allocation9 + $0x8] sm:$0xf]
          %v1249 = vld [vmem:[#allocation9 + $0xc] sm:$0xf]
          %v1250 = vld [vmem:[#allocation9 + $0x10] sm:$0xf]
          %v1251 = vld [vmem:[#allocation9 + $0x14] sm:$0xf]
          %v1252 = vld [vmem:[#allocation9 + $0x18] sm:$0xf]
          %v1253 = vld [vmem:[#allocation9 + $0x1c] sm:$0xf]
          %v1254 = vld [vmem:[#allocation9 + $0x20] sm:$0xf]
          %v1255 = vld [vmem:[#allocation9 + $0x24] sm:$0xf]
          %v1256 = vld [vmem:[#allocation9 + $0x28] sm:$0xf]
          %v1257 = vld [vmem:[#allocation9 + $0x2c] sm:$0xf]
          %v1258 = vld [vmem:[#allocation9 + $0x30] sm:$0xf]
          %v1259 = vld [vmem:[#allocation9 + $0x34] sm:$0xf]
          %v1260 = vld [vmem:[#allocation9 + $0x38] sm:$0xf]
          %v1261 = vld [vmem:[#allocation9 + $0x3c] sm:$0xf]
          %v1262 = vld [vmem:[#allocation9 + $0x40] sm:$0xf]
          %v1263 = vld [vmem:[#allocation9 + $0x44] sm:$0xf]
          %v1264 = vld [vmem:[#allocation9 + $0x48] sm:$0xf]
          %v1265 = vld [vmem:[#allocation9 + $0x4c] sm:$0xf]
          %v1266 = vld [vmem:[#allocation9 + $0x50] sm:$0xf]
          %v1267 = vld [vmem:[#allocation9 + $0x54] sm:$0xf]
          %v1268 = vld [vmem:[#allocation9 + $0x58] sm:$0xf]
          %v1269 = vld [vmem:[#allocation9 + $0x5c] sm:$0xf]
          %v1270 = vld [vmem:[#allocation9 + $0x60] sm:$0xf]
          %v1271 = vld [vmem:[#allocation9 + $0x64] sm:$0xf]
          %v1272 = vld [vmem:[#allocation9 + $0x68] sm:$0xf]
          %v1273 = vld [vmem:[#allocation9 + $0x6c] sm:$0xf]
          %v1274 = vld [vmem:[#allocation9 + $0x70] sm:$0xf]
          %v1275 = vld [vmem:[#allocation9 + $0x74] sm:$0xf]
          %v1276 = vld [vmem:[#allocation9 + $0x78] sm:$0xf]
          %v1277 = vld [vmem:[#allocation9 + $0x7c] sm:$0xf]
          %v1278 = vld [vmem:[#allocation9 + $0x80] sm:$0xf]
          %v1279 = vld [vmem:[#allocation9 + $0x84] sm:$0xf]
          %v1280 = vld [vmem:[#allocation9 + $0x88] sm:$0xf]
          %v1281 = vld [vmem:[#allocation9 + $0x8c] sm:$0xf]
          %v1282 = vld [vmem:[#allocation9 + $0x90] sm:$0xf]
          %v1283 = vld [vmem:[#allocation9 + $0x94] sm:$0xf]
          %v1284 = vld [vmem:[#allocation9 + $0x98] sm:$0xf]
          %v1285 = vld [vmem:[#allocation9 + $0x9c] sm:$0xf]
          %v1286 = vld [vmem:[#allocation9 + $0xa0] sm:$0xf]
          %v1287 = vld [vmem:[#allocation9 + $0xa4] sm:$0xf]
          %v1288 = vld [vmem:[#allocation9 + $0xa8] sm:$0xf]
          %v1289 = vld [vmem:[#allocation9 + $0xac] sm:$0xf]
          %v1290 = vld [vmem:[#allocation9 + $0xb0] sm:$0xf]
          %v1291 = vld [vmem:[#allocation9 + $0xb4] sm:$0xf]
          %v1292 = vld [vmem:[#allocation9 + $0xb8] sm:$0xf]
          %v1293 = vld [vmem:[#allocation9 + $0xbc] sm:$0xf]
          %v1294 = vld [vmem:[%s6] sm:$0x1]
          %v1296 = vlaneseq
          %v1297 = vshrl.u32 %v1296, 7
          %v1298 = vsub.s32 0, %v1297
          %v1299 = vrot.slane %v1294, %v1298
          %v1349 = vunpack.c.l.b16 %v1246
          %v1350 = vunpack.c.l.b16 %v1247
          %v1351 = vunpack.c.l.b16 %v1248
          %v1352 = vunpack.c.l.b16 %v1249
          %v1353 = vunpack.c.l.b16 %v1250
          %v1354 = vunpack.c.l.b16 %v1251
          %v1355 = vunpack.c.l.b16 %v1252
          %v1356 = vunpack.c.l.b16 %v1253
          %v1357 = vunpack.c.l.b16 %v1254
          %v1358 = vunpack.c.l.b16 %v1255
          %v1359 = vunpack.c.l.b16 %v1256
          %v1360 = vunpack.c.l.b16 %v1257
          %v1361 = vunpack.c.l.b16 %v1258
          %v1362 = vunpack.c.l.b16 %v1259
          %v1363 = vunpack.c.l.b16 %v1260
          %v1364 = vunpack.c.l.b16 %v1261
          %v1365 = vunpack.c.l.b16 %v1262
          %v1366 = vunpack.c.l.b16 %v1263
          %v1367 = vunpack.c.l.b16 %v1264
          %v1368 = vunpack.c.l.b16 %v1265
          %v1369 = vunpack.c.l.b16 %v1266
          %v1370 = vunpack.c.l.b16 %v1267
          %v1371 = vunpack.c.l.b16 %v1268
          %v1372 = vunpack.c.l.b16 %v1269
          %v1373 = vunpack.c.l.b16 %v1270
          %v1374 = vunpack.c.l.b16 %v1271
          %v1375 = vunpack.c.l.b16 %v1272
          %v1376 = vunpack.c.l.b16 %v1273
          %v1377 = vunpack.c.l.b16 %v1274
          %v1378 = vunpack.c.l.b16 %v1275
          %v1379 = vunpack.c.l.b16 %v1276
          %v1380 = vunpack.c.l.b16 %v1277
          %v1381 = vunpack.c.l.b16 %v1278
          %v1382 = vunpack.c.l.b16 %v1279
          %v1383 = vunpack.c.l.b16 %v1280
          %v1384 = vunpack.c.l.b16 %v1281
          %v1385 = vunpack.c.l.b16 %v1282
          %v1386 = vunpack.c.l.b16 %v1283
          %v1387 = vunpack.c.l.b16 %v1284
          %v1388 = vunpack.c.l.b16 %v1285
          %v1389 = vunpack.c.l.b16 %v1286
          %v1390 = vunpack.c.l.b16 %v1287
          %v1391 = vunpack.c.l.b16 %v1288
          %v1392 = vunpack.c.l.b16 %v1289
          %v1393 = vunpack.c.l.b16 %v1290
          %v1394 = vunpack.c.l.b16 %v1291
          %v1395 = vunpack.c.l.b16 %v1292
          %v1396 = vunpack.c.l.b16 %v1293
          %v1397 = vpack.c.b16 %v1350, %v1349
          %v1398 = vpack.c.b16 %v1352, %v1351
          %v1399 = vpack.c.b16 %v1354, %v1353
          %v1400 = vpack.c.b16 %v1356, %v1355
          %v1401 = vpack.c.b16 %v1358, %v1357
          %v1402 = vpack.c.b16 %v1360, %v1359
          %v1403 = vpack.c.b16 %v1362, %v1361
          %v1404 = vpack.c.b16 %v1364, %v1363
          %v1405 = vpack.c.b16 %v1366, %v1365
          %v1406 = vpack.c.b16 %v1368, %v1367
          %v1407 = vpack.c.b16 %v1370, %v1369
          %v1408 = vpack.c.b16 %v1372, %v1371
          %v1409 = vpack.c.b16 %v1374, %v1373
          %v1410 = vpack.c.b16 %v1376, %v1375
          %v1411 = vpack.c.b16 %v1378, %v1377
          %v1412 = vpack.c.b16 %v1380, %v1379
          %v1413 = vpack.c.b16 %v1382, %v1381
          %v1414 = vpack.c.b16 %v1384, %v1383
          %v1415 = vpack.c.b16 %v1386, %v1385
          %v1416 = vpack.c.b16 %v1388, %v1387
          %v1417 = vpack.c.b16 %v1390, %v1389
          %v1418 = vpack.c.b16 %v1392, %v1391
          %v1419 = vpack.c.b16 %v1394, %v1393
          %v1420 = vpack.c.b16 %v1396, %v1395
          %1445 = vmatprep.subr.bf16.mxu0 0
          %1446 = vmatpush1.bf16.msra.mxu0 %v1397
          %1447 = vmatprep.subr.bf16.mxu0 0
          %1448 = vmatpush1.bf16.msra.mxu0 %v1398
          %1449 = vmatprep.subr.bf16.mxu0 0
          %1450 = vmatpush1.bf16.msra.mxu0 %v1399
          %1451 = vmatprep.subr.bf16.mxu0 0
          %1452 = vmatpush1.bf16.msra.mxu0 %v1400
          %1453 = vmatprep.subr.bf16.mxu0 0
          %1454 = vmatpush1.bf16.msra.mxu0 %v1401
          %1455 = vmatprep.subr.bf16.mxu0 0
          %1456 = vmatpush1.bf16.msra.mxu0 %v1402
          %1457 = vmatprep.subr.bf16.mxu0 0
          %1458 = vmatpush1.bf16.msra.mxu0 %v1403
          %1459 = vmatprep.subr.bf16.mxu0 0
          %1460 = vmatpush1.bf16.msra.mxu0 %v1404
          %1461 = vmatprep.subr.bf16.mxu0 0
          %1462 = vmatpush1.bf16.msra.mxu0 %v1405
          %1463 = vmatprep.subr.bf16.mxu0 0
          %1464 = vmatpush1.bf16.msra.mxu0 %v1406
          %1465 = vmatprep.subr.bf16.mxu0 0
          %1466 = vmatpush1.bf16.msra.mxu0 %v1407
          %1467 = vmatprep.subr.bf16.mxu0 0
          %1468 = vmatpush1.bf16.msra.mxu0 %v1408
          %1469 = vmatprep.subr.bf16.mxu0 0
          %1470 = vmatpush1.bf16.msra.mxu0 %v1409
          %1471 = vmatprep.subr.bf16.mxu0 0
          %1472 = vmatpush1.bf16.msra.mxu0 %v1410
          %1473 = vmatprep.subr.bf16.mxu0 0
          %1474 = vmatpush1.bf16.msra.mxu0 %v1411
          %1475 = vmatprep.subr.bf16.mxu0 0
          %1476 = vmatpush1.bf16.msra.mxu0 %v1412
          %1477 = vmatprep.mubr.bf16.mxu0 %v1238
          %1478 = vmatmul.mubr.bf16.gmra.mrb[0].mxu0 %v1237
          %v1479 = vpop.f32.mrb[0].mxu0
          %v1480 = vadd.f32 %v1299, %v1479
          %v1481 = vpop.f32.mrb[0].mxu0
          %v1482 = vpop.f32.mrb[0].mxu0
          %v1483 = vadd.f32 %v1299, %v1482
          %v1484 = vpop.f32.mrb[0].mxu0
          %1485 = vmatprep.mubr.bf16.mxu0 %v1241
          %1486 = vmatmul.mubr.bf16.gmra.mrb[0].mxu0 %v1240
          %v1487 = vpop.f32.mrb[0].mxu0
          %v1488 = vadd.f32 %v1299, %v1487
          %v1489 = vpop.f32.mrb[0].mxu0
          %v1490 = vpop.f32.mrb[0].mxu0
          %v1491 = vadd.f32 %v1299, %v1490
          %v1492 = vpop.f32.mrb[0].mxu0
          %1493 = vmatprep.mubr.bf16.mxu0 %v1244
          %1494 = vmatmul.mubr.bf16.gmra.mrb[0].mxu0 %v1243
          %v1495 = vpop.f32.mrb[0].mxu0
          %v1496 = vadd.f32 %v1299, %v1495
          %v1497 = vpop.f32.mrb[0].mxu0
          %v1498 = vpop.f32.mrb[0].mxu0
          %v1499 = vadd.f32 %v1299, %v1498
          %v1500 = vpop.f32.mrb[0].mxu0
          %1501 = vdwg.mxu0
          %1502 = vmatprep.subr.bf16.mxu0 0
          %1503 = vmatpush1.bf16.msra.mxu0 %v1413
          %1504 = vmatprep.subr.bf16.mxu0 0
          %1505 = vmatpush1.bf16.msra.mxu0 %v1414
          %1506 = vmatprep.subr.bf16.mxu0 0
          %1507 = vmatpush1.bf16.msra.mxu0 %v1415
          %1508 = vmatprep.subr.bf16.mxu0 0
          %1509 = vmatpush1.bf16.msra.mxu0 %v1416
          %1510 = vmatprep.subr.bf16.mxu0 0
          %1511 = vmatpush1.bf16.msra.mxu0 %v1417
          %1512 = vmatprep.subr.bf16.mxu0 0
          %1513 = vmatpush1.bf16.msra.mxu0 %v1418
          %1514 = vmatprep.subr.bf16.mxu0 0
          %1515 = vmatpush1.bf16.msra.mxu0 %v1419
          %1516 = vmatprep.subr.bf16.mxu0 0
          %1517 = vmatpush1.bf16.msra.mxu0 %v1420
          %1518 = vmatprep.subr.bf16.mxu0 0
          %1519 = vmatpush1.bf16.msra.mxu0 0
          %1520 = vmatprep.subr.bf16.mxu0 0
          %1521 = vmatpush1.bf16.msra.mxu0 0
          %1522 = vmatprep.subr.bf16.mxu0 0
          %1523 = vmatpush1.bf16.msra.mxu0 0
          %1524 = vmatprep.subr.bf16.mxu0 0
          %1525 = vmatpush1.bf16.msra.mxu0 0
          %1526 = vmatprep.subr.bf16.mxu0 0
          %1527 = vmatpush1.bf16.msra.mxu0 0
          %1528 = vmatprep.subr.bf16.mxu0 0
          %1529 = vmatpush1.bf16.msra.mxu0 0
          %1530 = vmatprep.subr.bf16.mxu0 0
          %1531 = vmatpush1.bf16.msra.mxu0 0
          %1532 = vmatprep.subr.bf16.mxu0 0
          %1533 = vmatpush1.bf16.msra.mxu0 0
          %1534 = vmatprep.mubr.bf16.mxu0 0
          %1535 = vmatmul.mubr.bf16.gmra.mrb[0].mxu0 %v1239
          %v1536 = vpop.f32.mrb[0].mxu0
          %v1537 = vadd.f32 %v1480, %v1536
          %v1538 = vpop.f32.mrb[0].mxu0
          %v1539 = vpop.f32.mrb[0].mxu0
          %v1540 = vadd.f32 %v1483, %v1539
          %v1541 = vpop.f32.mrb[0].mxu0
          %1542 = vmatprep.mubr.bf16.mxu0 0
          %1543 = vmatmul.mubr.bf16.gmra.mrb[0].mxu0 %v1242
          %v1544 = vpop.f32.mrb[0].mxu0
          %v1545 = vadd.f32 %v1488, %v1544
          %v1546 = vpop.f32.mrb[0].mxu0
          %v1547 = vpop.f32.mrb[0].mxu0
          %v1548 = vadd.f32 %v1491, %v1547
          %v1549 = vpop.f32.mrb[0].mxu0
          %1550 = vmatprep.mubr.bf16.mxu0 0
          %1551 = vmatmul.mubr.bf16.gmra.mrb[0].mxu0 %v1245
          %v1552 = vpop.f32.mrb[0].mxu0
          %v1553 = vadd.f32 %v1496, %v1552
          %v1554 = vpop.f32.mrb[0].mxu0
          %v1555 = vpop.f32.mrb[0].mxu0
          %v1556 = vadd.f32 %v1499, %v1555
          %v1557 = vpop.f32.mrb[0].mxu0
          %1558 = vdwg.mxu0
          %v1559 = vld [vmem:[%s417] sm:$0xff]
          %v1560 = vld [vmem:[%s417 + $0x8] sm:$0xff]
          %v1561 = vld [vmem:[%s417 + $0x10] sm:$0xff]
          %v1562 = vld [vmem:[%s417 + $0x18] sm:$0xff]
          %v1563 = vld [vmem:[%s417 + $0x20] sm:$0xff]
          %v1564 = vld [vmem:[%s417 + $0x28] sm:$0xff]
          %v1565 = vadd.f32 %v1559, %v1537
          %v1566 = vadd.f32 %v1560, %v1540
          %v1567 = vadd.f32 %v1561, %v1545
          %v1568 = vadd.f32 %v1562, %v1548
          %v1569 = vadd.f32 %v1563, %v1553
          %v1570 = vadd.f32 %v1564, %v1556
          %v1571 = vpack.c.bf16 %v1215, %v1210
          %v1572 = vpack.c.bf16 %v1225, %v1220
          %v1573 = vpack.c.bf16 %v1235, %v1230
          %v1574 = vld [vmem:[#allocation10] sm:$0xf]
          %v1575 = vld [vmem:[#allocation10 + $0x4] sm:$0xf]
          %v1576 = vld [vmem:[#allocation10 + $0x8] sm:$0xf]
          %v1577 = vld [vmem:[#allocation10 + $0xc] sm:$0xf]
          %v1578 = vld [vmem:[#allocation10 + $0x10] sm:$0xf]
          %v1579 = vld [vmem:[#allocation10 + $0x14] sm:$0xf]
          %v1580 = vld [vmem:[#allocation10 + $0x18] sm:$0xf]
          %v1581 = vld [vmem:[#allocation10 + $0x1c] sm:$0xf]
          %v1582 = vld [vmem:[#allocation10 + $0x20] sm:$0xf]
          %v1583 = vld [vmem:[#allocation10 + $0x24] sm:$0xf]
          %v1584 = vld [vmem:[#allocation10 + $0x28] sm:$0xf]
          %v1585 = vld [vmem:[#allocation10 + $0x2c] sm:$0xf]
          %v1586 = vld [vmem:[#allocation10 + $0x30] sm:$0xf]
          %v1587 = vld [vmem:[#allocation10 + $0x34] sm:$0xf]
          %v1588 = vld [vmem:[#allocation10 + $0x38] sm:$0xf]
          %v1589 = vld [vmem:[#allocation10 + $0x3c] sm:$0xf]
          %v1606 = vunpack.c.l.b16 %v1574
          %v1607 = vunpack.c.l.b16 %v1575
          %v1608 = vunpack.c.l.b16 %v1576
          %v1609 = vunpack.c.l.b16 %v1577
          %v1610 = vunpack.c.l.b16 %v1578
          %v1611 = vunpack.c.l.b16 %v1579
          %v1612 = vunpack.c.l.b16 %v1580
          %v1613 = vunpack.c.l.b16 %v1581
          %v1614 = vunpack.c.l.b16 %v1582
          %v1615 = vunpack.c.l.b16 %v1583
          %v1616 = vunpack.c.l.b16 %v1584
          %v1617 = vunpack.c.l.b16 %v1585
          %v1618 = vunpack.c.l.b16 %v1586
          %v1619 = vunpack.c.l.b16 %v1587
          %v1620 = vunpack.c.l.b16 %v1588
          %v1621 = vunpack.c.l.b16 %v1589
          %v1622 = vpack.c.b16 %v1607, %v1606
          %v1623 = vpack.c.b16 %v1609, %v1608
          %v1624 = vpack.c.b16 %v1611, %v1610
          %v1625 = vpack.c.b16 %v1613, %v1612
          %v1626 = vpack.c.b16 %v1615, %v1614
          %v1627 = vpack.c.b16 %v1617, %v1616
          %v1628 = vpack.c.b16 %v1619, %v1618
          %v1629 = vpack.c.b16 %v1621, %v1620
          %1638 = vmatprep.subr.bf16.mxu0 0
          %1639 = vmatpush1.bf16.msra.mxu0 %v1622
          %1640 = vmatprep.subr.bf16.mxu0 0
          %1641 = vmatpush1.bf16.msra.mxu0 %v1623
          %1642 = vmatprep.subr.bf16.mxu0 0
          %1643 = vmatpush1.bf16.msra.mxu0 %v1624
          %1644 = vmatprep.subr.bf16.mxu0 0
          %1645 = vmatpush1.bf16.msra.mxu0 %v1625
          %1646 = vmatprep.subr.bf16.mxu0 0
          %1647 = vmatpush1.bf16.msra.mxu0 %v1626
          %1648 = vmatprep.subr.bf16.mxu0 0
          %1649 = vmatpush1.bf16.msra.mxu0 %v1627
          %1650 = vmatprep.subr.bf16.mxu0 0
          %1651 = vmatpush1.bf16.msra.mxu0 %v1628
          %1652 = vmatprep.subr.bf16.mxu0 0
          %1653 = vmatpush1.bf16.msra.mxu0 %v1629
          %1654 = vmatprep.subr.bf16.mxu0 0
          %1655 = vmatpush1.bf16.msra.mxu0 0
          %1656 = vmatprep.subr.bf16.mxu0 0
          %1657 = vmatpush1.bf16.msra.mxu0 0
          %1658 = vmatprep.subr.bf16.mxu0 0
          %1659 = vmatpush1.bf16.msra.mxu0 0
          %1660 = vmatprep.subr.bf16.mxu0 0
          %1661 = vmatpush1.bf16.msra.mxu0 0
          %1662 = vmatprep.subr.bf16.mxu0 0
          %1663 = vmatpush1.bf16.msra.mxu0 0
          %1664 = vmatprep.subr.bf16.mxu0 0
          %1665 = vmatpush1.bf16.msra.mxu0 0
          %1666 = vmatprep.subr.bf16.mxu0 0
          %1667 = vmatpush1.bf16.msra.mxu0 0
          %1668 = vmatprep.subr.bf16.mxu0 0
          %1669 = vmatpush1.bf16.msra.mxu0 0
          %1670 = vmatprep.mubr.bf16.mxu0 0
          %1671 = vmatmul.mubr.bf16.gmra.mrb[0].mxu0 %v1571
          %v1672 = vpop.f32.mrb[0].mxu0
          %v1673 = vadd.f32 0.0, %v1672
          %v1674 = vpop.f32.mrb[0].mxu0
          %v1675 = vpop.f32.mrb[0].mxu0
          %v1676 = vadd.f32 0.0, %v1675
          %v1677 = vpop.f32.mrb[0].mxu0
          %1678 = vmatprep.mubr.bf16.mxu0 0
          %1679 = vmatmul.mubr.bf16.gmra.mrb[0].mxu0 %v1572
          %v1680 = vpop.f32.mrb[0].mxu0
          %v1681 = vadd.f32 0.0, %v1680
          %v1682 = vpop.f32.mrb[0].mxu0
          %v1683 = vpop.f32.mrb[0].mxu0
          %v1684 = vadd.f32 0.0, %v1683
          %v1685 = vpop.f32.mrb[0].mxu0
          %1686 = vmatprep.mubr.bf16.mxu0 0
          %1687 = vmatmul.mubr.bf16.gmra.mrb[0].mxu0 %v1573
          %v1688 = vpop.f32.mrb[0].mxu0
          %v1689 = vadd.f32 0.0, %v1688
          %v1690 = vpop.f32.mrb[0].mxu0
          %v1691 = vpop.f32.mrb[0].mxu0
          %v1692 = vadd.f32 0.0, %v1691
          %v1693 = vpop.f32.mrb[0].mxu0
          %1694 = vdwg.mxu0
          %v1695 = vadd.f32 %v1565, %v1673
          %v1696 = vadd.f32 %v1566, %v1676
          %v1697 = vadd.f32 %v1567, %v1681
          %v1698 = vadd.f32 %v1568, %v1684
          %v1699 = vadd.f32 %v1569, %v1689
          %v1700 = vadd.f32 %v1570, %v1692
          %1701 = vst [vmem:[%s464] sm:$0xff] %v1695
          %1702 = vst [vmem:[%s464 + $0x8] sm:$0xff] %v1696
          %1703 = vst [vmem:[%s464 + $0x10] sm:$0xff] %v1697
          %1704 = vst [vmem:[%s464 + $0x18] sm:$0xff] %v1698
          %1705 = vst [vmem:[%s464 + $0x20] sm:$0xff] %v1699
          %1706 = vst [vmem:[%s464 + $0x28] sm:$0xff] %v1700
          %v1707 = vpack.c.bf16 %v1216, %v1211
          %v1708 = vpack.c.bf16 %v1226, %v1221
          %v1709 = vpack.c.bf16 %v1236, %v1231
          %v1710 = vld [vmem:[#allocation12] sm:$0xf]
          %v1711 = vld [vmem:[#allocation12 + $0x4] sm:$0xf]
          %v1712 = vld [vmem:[#allocation12 + $0x8] sm:$0xf]
          %v1713 = vld [vmem:[#allocation12 + $0xc] sm:$0xf]
          %v1714 = vld [vmem:[#allocation12 + $0x10] sm:$0xf]
          %v1715 = vld [vmem:[#allocation12 + $0x14] sm:$0xf]
          %v1716 = vld [vmem:[#allocation12 + $0x18] sm:$0xf]
          %v1717 = vld [vmem:[#allocation12 + $0x1c] sm:$0xf]
          %v1718 = vld [vmem:[#allocation12 + $0x20] sm:$0xf]
          %v1719 = vld [vmem:[#allocation12 + $0x24] sm:$0xf]
          %v1720 = vld [vmem:[#allocation12 + $0x28] sm:$0xf]
          %v1721 = vld [vmem:[#allocation12 + $0x2c] sm:$0xf]
          %v1722 = vld [vmem:[#allocation12 + $0x30] sm:$0xf]
          %v1723 = vld [vmem:[#allocation12 + $0x34] sm:$0xf]
          %v1724 = vld [vmem:[#allocation12 + $0x38] sm:$0xf]
          %v1725 = vld [vmem:[#allocation12 + $0x3c] sm:$0xf]
          %v1742 = vunpack.c.l.b16 %v1710
          %v1743 = vunpack.c.l.b16 %v1711
          %v1744 = vunpack.c.l.b16 %v1712
          %v1745 = vunpack.c.l.b16 %v1713
          %v1746 = vunpack.c.l.b16 %v1714
          %v1747 = vunpack.c.l.b16 %v1715
          %v1748 = vunpack.c.l.b16 %v1716
          %v1749 = vunpack.c.l.b16 %v1717
          %v1750 = vunpack.c.l.b16 %v1718
          %v1751 = vunpack.c.l.b16 %v1719
          %v1752 = vunpack.c.l.b16 %v1720
          %v1753 = vunpack.c.l.b16 %v1721
          %v1754 = vunpack.c.l.b16 %v1722
          %v1755 = vunpack.c.l.b16 %v1723
          %v1756 = vunpack.c.l.b16 %v1724
          %v1757 = vunpack.c.l.b16 %v1725
          %v1758 = vpack.c.b16 %v1743, %v1742
          %v1759 = vpack.c.b16 %v1745, %v1744
          %v1760 = vpack.c.b16 %v1747, %v1746
          %v1761 = vpack.c.b16 %v1749, %v1748
          %v1762 = vpack.c.b16 %v1751, %v1750
          %v1763 = vpack.c.b16 %v1753, %v1752
          %v1764 = vpack.c.b16 %v1755, %v1754
          %v1765 = vpack.c.b16 %v1757, %v1756
          %1774 = vmatprep.subr.bf16.mxu0 0
          %1775 = vmatpush1.bf16.msra.mxu0 %v1758
          %1776 = vmatprep.subr.bf16.mxu0 0
          %1777 = vmatpush1.bf16.msra.mxu0 %v1759
          %1778 = vmatprep.subr.bf16.mxu0 0
          %1779 = vmatpush1.bf16.msra.mxu0 %v1760
          %1780 = vmatprep.subr.bf16.mxu0 0
          %1781 = vmatpush1.bf16.msra.mxu0 %v1761
          %1782 = vmatprep.subr.bf16.mxu0 0
          %1783 = vmatpush1.bf16.msra.mxu0 %v1762
          %1784 = vmatprep.subr.bf16.mxu0 0
          %1785 = vmatpush1.bf16.msra.mxu0 %v1763
          %1786 = vmatprep.subr.bf16.mxu0 0
          %1787 = vmatpush1.bf16.msra.mxu0 %v1764
          %1788 = vmatprep.subr.bf16.mxu0 0
          %1789 = vmatpush1.bf16.msra.mxu0 %v1765
          %1790 = vmatprep.subr.bf16.mxu0 0
          %1791 = vmatpush1.bf16.msra.mxu0 0
          %1792 = vmatprep.subr.bf16.mxu0 0
          %1793 = vmatpush1.bf16.msra.mxu0 0
          %1794 = vmatprep.subr.bf16.mxu0 0
          %1795 = vmatpush1.bf16.msra.mxu0 0
          %1796 = vmatprep.subr.bf16.mxu0 0
          %1797 = vmatpush1.bf16.msra.mxu0 0
          %1798 = vmatprep.subr.bf16.mxu0 0
          %1799 = vmatpush1.bf16.msra.mxu0 0
          %1800 = vmatprep.subr.bf16.mxu0 0
          %1801 = vmatpush1.bf16.msra.mxu0 0
          %1802 = vmatprep.subr.bf16.mxu0 0
          %1803 = vmatpush1.bf16.msra.mxu0 0
          %1804 = vmatprep.subr.bf16.mxu0 0
          %1805 = vmatpush1.bf16.msra.mxu0 0
          %1806 = vmatprep.mubr.bf16.mxu0 0
          %1807 = vmatmul.mubr.bf16.gmra.mrb[0].mxu0 %v1707
          %v1808 = vpop.f32.mrb[0].mxu0
          %v1809 = vadd.f32 0.0, %v1808
          %v1810 = vpop.f32.mrb[0].mxu0
          %v1811 = vpop.f32.mrb[0].mxu0
          %v1812 = vadd.f32 0.0, %v1811
          %v1813 = vpop.f32.mrb[0].mxu0
          %1814 = vmatprep.mubr.bf16.mxu0 0
          %1815 = vmatmul.mubr.bf16.gmra.mrb[0].mxu0 %v1708
          %v1816 = vpop.f32.mrb[0].mxu0
          %v1817 = vadd.f32 0.0, %v1816
          %v1818 = vpop.f32.mrb[0].mxu0
          %v1819 = vpop.f32.mrb[0].mxu0
          %v1820 = vadd.f32 0.0, %v1819
          %v1821 = vpop.f32.mrb[0].mxu0
          %1822 = vmatprep.mubr.bf16.mxu0 0
          %1823 = vmatmul.mubr.bf16.gmra.mrb[0].mxu0 %v1709
          %v1824 = vpop.f32.mrb[0].mxu0
          %v1825 = vadd.f32 0.0, %v1824
          %v1826 = vpop.f32.mrb[0].mxu0
          %v1827 = vpop.f32.mrb[0].mxu0
          %v1828 = vadd.f32 0.0, %v1827
          %v1829 = vpop.f32.mrb[0].mxu0
          %1830 = vdwg.mxu0
          %v1831 = vadd.f32 %v1565, %v1809
          %v1832 = vadd.f32 %v1566, %v1812
          %v1833 = vadd.f32 %v1567, %v1817
          %v1834 = vadd.f32 %v1568, %v1820
          %v1835 = vadd.f32 %v1569, %v1825
          %v1836 = vadd.f32 %v1570, %v1828
          %1837 = vst [vmem:[%s471] sm:$0xff] %v1831
          %1838 = vst [vmem:[%s471 + $0x8] sm:$0xff] %v1832
          %1839 = vst [vmem:[%s471 + $0x10] sm:$0xff] %v1833
          %1840 = vst [vmem:[%s471 + $0x18] sm:$0xff] %v1834
          %1841 = vst [vmem:[%s471 + $0x20] sm:$0xff] %v1835
          %1842 = vst [vmem:[%s471 + $0x28] sm:$0xff] %v1836
        $region80: #{tpu_custom_call.1} parent=47 // pred_fallthru
          _
        %s1843 = sand.u32 %s210, 1
        %s1844 = scalar_lea.sflag [#allocation5], %s1843
        %s1845 = sand.u32 %s210, 1
        %s1846 = smul.addr %s1845, 48
        %s1847 = scalar_lea.vmem [#allocation13], %s1846
        %s1848 = sand.u32 %s236, 1
        %s1849 = scalar_lea.sflag [#allocation15], %s1848
        %s1850 = sand.u32 %s236, 1
        %s1851 = smul.addr %s1850, 48
        %s1852 = scalar_lea.vmem [#allocation14], %s1851
        // Predicated region
        $region81: #{tpu_custom_call.1} parent=47 // pred_check
          %p1853 = pneg %p220
        $region82: #{tpu_custom_call.1} parent=47 // pred_check_branch
          %1855 = sbr.rel (%p1853) target = $region84
        $region83: #{tpu_custom_call.1} parent=47 // pred_region
          %s1856 = smul.u32 6, %s35
          %s1858 = ssub.s32 768, 768
          %1859 = vsyncadd %s1844, %s1858
          %s1860 = smul.addr %s1856, 128
          %s1861 = scalar_lea.hbm %s7, %s1860
          %s1862 = sshll.u32 %s1847, 4
          %s1863 = int_to_ptr.vmem [resolvable:$true] %s1862
          %1868 = dma.vmem_to_hbm [thread:$0]  %s1863, 768, %s1861, %s1844, 128, 128, 8
        $region84: #{tpu_custom_call.1} parent=47 // pred_fallthru
          _
        // Predicated region
        $region85: #{tpu_custom_call.1} parent=47 // pred_check
          %p1869 = pneg %p246
        $region86: #{tpu_custom_call.1} parent=47 // pred_check_branch
          %1871 = sbr.rel (%p1869) target = $region88
        $region87: #{tpu_custom_call.1} parent=47 // pred_region
          %s1872 = smul.u32 6, %s35
          %s1874 = ssub.s32 768, 768
          %1875 = vsyncadd %s1849, %s1874
          %s1876 = smul.addr %s1872, 128
          %s1877 = scalar_lea.hbm %s8, %s1876
          %s1878 = sshll.u32 %s1852, 4
          %s1879 = int_to_ptr.vmem [resolvable:$true] %s1878
          %1884 = dma.vmem_to_hbm [thread:$0]  %s1879, 768, %s1877, %s1849, 128, 128, 8
        $region88: #{tpu_custom_call.1} parent=47 // pred_fallthru
          _
      $region48: #{tpu_custom_call.1} parent=5 // pred_fallthru
        _
      %p1885 = scmp.le.s32.totalorder 2, %s26
      // Predicated region
      $region89: #{tpu_custom_call.1} parent=5 // pred_check
        %p1886 = pneg %p1885
      $region90: #{tpu_custom_call.1} parent=5 // pred_check_branch
        %1888 = sbr.rel (%p1886) target = $region92
      $region91: #{tpu_custom_call.1} parent=5 // pred_region
        %s1889 = ssub.s32 %s26, 2
        // Predicated region
        $region93: #{tpu_custom_call.1} parent=91 // pred_check
          %p1890 = pneg %p226
        $region94: #{tpu_custom_call.1} parent=91 // pred_check_branch
          %1892 = sbr.rel (%p1890) target = $region96
        $region95: #{tpu_custom_call.1} parent=91 // pred_region
          %s1893 = sand.u32 %s211, 1
          %s1894 = scalar_lea.sflag [#allocation5], %s1893
          %s1895 = sand.u32 %s211, 1
          %s1896 = smul.addr %s1895, 48
          %s1897 = scalar_lea.vmem [#allocation13], %s1896
          %1898 = dma.done %s1894, 768
        $region96: #{tpu_custom_call.1} parent=91 // pred_fallthru
          _
        // Predicated region
        $region97: #{tpu_custom_call.1} parent=91 // pred_check
          %p1899 = pneg %p252
        $region98: #{tpu_custom_call.1} parent=91 // pred_check_branch
          %1901 = sbr.rel (%p1899) target = $region100
        $region99: #{tpu_custom_call.1} parent=91 // pred_region
          %s1902 = sand.u32 %s237, 1
          %s1903 = scalar_lea.sflag [#allocation15], %s1902
          %s1904 = sand.u32 %s237, 1
          %s1905 = smul.addr %s1904, 48
          %s1906 = scalar_lea.vmem [#allocation14], %s1905
          %1907 = dma.done %s1903, 768
        $region100: #{tpu_custom_call.1} parent=91 // pred_fallthru
          _
      $region92: #{tpu_custom_call.1} parent=5 // pred_fallthru
        _
    $region6: #{tpu_custom_call.1} parent=1 // loop_footer
      %s30 = sadd.s32 1, %s26
    $region7: #{tpu_custom_call.1} parent=1 // loop_footer_branch
      %25 = sbr.rel target = $region3
    $region8: #{tpu_custom_call.1} parent=1 // loop_exit
      _
    %1908 = vsyncpa [#allocation4], 1
    %s1909 = scalar_lea.sflag [#allocation4], 1
    %1910 = vsyncpa %s1909, 1
    %1911 = vsyncpa [#allocation7], 1
    %1912 = vsyncpa [#allocation11], 1
    %1913 = vsyncpa [#allocation5], 1
    %s1914 = scalar_lea.sflag [#allocation5], 1
    %1915 = vsyncpa %s1914, 1
    %1916 = vsyncpa [#allocation15], 1
    %s1917 = scalar_lea.sflag [#allocation15], 1
    %1918 = vsyncpa %s1917, 1

</llo_original>
